<compile_context>
chip_gen: v7x
topology: tpu7x:2x2x1
jax: 0.10.0
libtpu: 0.0.40
codegen_flags: <defaults>
</compile_context>

<pallas_src>
import functools

import jax
import jax.numpy as jnp
from jax.experimental import pallas as pl
from jax.experimental.pallas import tpu as pltpu

# ---------------- config ----------------
T = 8                                    # total tokens (single prefill sequence)
HIDDEN = 64
NUM_HEADS = 4
HEAD_SIZE = HIDDEN // NUM_HEADS          # 16
NUM_KV_HEADS = 2
NUM_GROUPS = NUM_HEADS // NUM_KV_HEADS   # 2
INTERMEDIATE = 128
EPS = 1e-5
SOFTMAX_SCALE = HEAD_SIZE ** (-0.5)

ACT_DTYPE = jnp.bfloat16                 # activations / weights fed to the MXU
CACHE_DTYPE = jnp.float32                # simplified kv-cache storage dtype
NUM_SLOTS = 16

Q_SIZE = NUM_HEADS * HEAD_SIZE           # 64
KV_SIZE = NUM_KV_HEADS * HEAD_SIZE       # 32
QK_SIZE = Q_SIZE + KV_SIZE               # 96
QKV_SIZE = Q_SIZE + 2 * KV_SIZE          # 128


# ---------------- fused layer kernel ----------------
def cohere_layer_kernel(
    # inputs
    hs_ref, resid_ref, ln_w_ref, w_qkv_ref, w_o_ref, w_gu_ref, w_down_ref,
    rope_cos_ref, rope_sin_ref, pswap_ref, slots_ref,
    cache_k_in_ref, cache_v_in_ref,          # aliased HBM buffers (same as outputs)
    # outputs
    out_ref, res_ref, cache_k_out_ref, cache_v_out_ref,
    # scratch
    k_new_vmem, v_new_vmem, dma_sem,
    *, eps, scale, num_heads, num_kv_heads, head_size, inter,
):
    del cache_k_in_ref, cache_v_in_ref       # only needed for in-place aliasing
    t = hs_ref.shape[0]
    d = head_size
    groups = num_heads // num_kv_heads
    q_sz = num_heads * d
    kv_sz = num_kv_heads * d
    cdt = w_qkv_ref.dtype                    # bf16 compute dtype for MXU inputs

    # ---- residual add + LayerNorm (no bias), f32 math; emit `res` ----
    x = hs_ref[...].astype(jnp.float32) + resid_ref[...].astype(jnp.float32)
    res_ref[...] = x.astype(res_ref.dtype)
    mean = jnp.mean(x, axis=-1, keepdims=True)
    xc = x - mean
    var = jnp.mean(xc * xc, axis=-1, keepdims=True)
    normed = xc * jax.lax.rsqrt(var + eps) * ln_w_ref[...].astype(jnp.float32)
    normed_c = normed.astype(cdt)

    # ---- fused QKV projection (bf16 x bf16 -> f32 accumulate) ----
    qkv = jnp.dot(normed_c, w_qkv_ref[...], preferred_element_type=jnp.float32)

    # ---- Cohere interleaved rotary on the q|k slab ----
    #   r[2j]   = x[2j]  * cos[j] - x[2j+1] * sin[j]
    #   r[2j+1] = x[2j+1]* cos[j] + x[2j]   * sin[j]
    # == x * cos_dup + pair_swap(x) * sin_signed ; pair_swap via constant
    # permutation matmul (keeps the cached key in the reference layout).
    qk = qkv[:, :q_sz + kv_sz]
    v_new = qkv[:, q_sz + kv_sz:]
    qk_swap = jnp.dot(qk, pswap_ref[...], preferred_element_type=jnp.float32)
    qk_rot = qk * rope_cos_ref[...] + qk_swap * rope_sin_ref[...]

    # ---- KV-cache scatter: start DMAs early so they overlap attention/MLP ----
    k_new_vmem[...] = qk_rot[:, q_sz:].astype(k_new_vmem.dtype)
    v_new_vmem[...] = v_new.astype(v_new_vmem.dtype)
    copies = []
    for i in range(t):                        # static unroll (t small & static)
        slot = slots_ref[i]
        ck = pltpu.make_async_copy(k_new_vmem.at[pl.ds(i, 1)],
                                   cache_k_out_ref.at[pl.ds(slot, 1)],
                                   dma_sem.at[0, i])
        cv = pltpu.make_async_copy(v_new_vmem.at[pl.ds(i, 1)],
                                   cache_v_out_ref.at[pl.ds(slot, 1)],
                                   dma_sem.at[1, i])
        ck.start()
        cv.start()
        copies.append((ck, cv))

    # ---- causal GQA prefill attention + O-projection (no K/V repeat) ----
    qi = jax.lax.broadcasted_iota(jnp.int32, (t, t), 0)
    ki = jax.lax.broadcasted_iota(jnp.int32, (t, t), 1)
    causal = ki <= qi
    w_o = w_o_ref[...]
    attn_out = jnp.zeros((t, w_o.shape[1]), jnp.float32)
    # TODO(synk): for production seq lengths, grid the token axis ("parallel",
    # v7x 2 TCs) and a KV axis ("arbitrary") with online-softmax flash
    # accumulation instead of full [T, T] scores.
    for h in range(num_heads):                # static unroll over query heads
        kv = h // groups                      # GQA: head h reads kv head h // G
        q_h = qk_rot[:, h * d:(h + 1) * d]
        k_h = qk_rot[:, q_sz + kv * d:q_sz + (kv + 1) * d]
        v_h = v_new[:, kv * d:(kv + 1) * d]
        s = jax.lax.dot_general(q_h, k_h, (((1,), (1,)), ((), ())),
                                preferred_element_type=jnp.float32) * scale
        s = jnp.where(causal, s, -1e30)
        m = jnp.max(s, axis=-1, keepdims=True)
        p = jnp.exp(s - m)
        p = p * pl.reciprocal(jnp.sum(p, axis=-1, keepdims=True), approx=True)
        o_h = jnp.dot(p.astype(cdt), v_h.astype(cdt),
                      preferred_element_type=jnp.float32)
        # o_proj accumulated per head: attn @ Wo^T == sum_h o_h @ Wo^T[h*d:(h+1)*d]
        attn_out = attn_out + jnp.dot(o_h.astype(cdt),
                                      w_o[h * d:(h + 1) * d, :],
                                      preferred_element_type=jnp.float32)

    # ---- MLP: silu(gate) * up -> down projection; fused epilogue add ----
    gu = jnp.dot(normed_c, w_gu_ref[...], preferred_element_type=jnp.float32)
    act = jax.nn.silu(gu[:, :inter]) * gu[:, inter:]
    mlp_out = jnp.dot(act.astype(cdt), w_down_ref[...],
                      preferred_element_type=jnp.float32)

    out_ref[...] = (attn_out + mlp_out).astype(out_ref.dtype)

    # drain the cache-update DMAs before the kernel exits
    for ck, cv in copies:
        ck.wait()
        cv.wait()


# ---------------- wrapper ----------------
@jax.jit
def flash_cohere_layer(hidden_states, residual, cos, sin, cache_k, cache_v,
                       slots, weights):
    """One FlashCohereLayer forward. Returns ((output, res), (new_k, new_v))."""
    t = hidden_states.shape[0]
    if residual is None:
        residual = jnp.zeros_like(hidden_states)

    # Rotary tables expanded to the flat [T, (H + KVH) * D] q|k feature layout.
    cos_dup = jnp.repeat(cos.astype(jnp.float32), 2, axis=-1)                     # [T, D]
    sin_sgn = jnp.stack([-sin, sin], axis=-1).reshape(t, -1).astype(jnp.float32)  # [T, D]
    reps = NUM_HEADS + NUM_KV_HEADS
    rope_cos = jnp.tile(cos_dup, (1, reps))                                       # [T, 96]
    rope_sin = jnp.tile(sin_sgn, (1, reps))                                       # [T, 96]

    kernel = functools.partial(
        cohere_layer_kernel, eps=EPS, scale=SOFTMAX_SCALE, num_heads=NUM_HEADS,
        num_kv_heads=NUM_KV_HEADS, head_size=HEAD_SIZE, inter=INTERMEDIATE)

    vmem = pltpu.MemorySpace.VMEM
    in_specs = [pl.BlockSpec(memory_space=vmem)] * 10 + [
        pl.BlockSpec(memory_space=pltpu.MemorySpace.SMEM),   # slots
        pl.BlockSpec(memory_space=pl.ANY),                   # cache_k (HBM, aliased)
        pl.BlockSpec(memory_space=pl.ANY),                   # cache_v (HBM, aliased)
    ]
    out_specs = [
        pl.BlockSpec(memory_space=vmem),                     # output
        pl.BlockSpec(memory_space=vmem),                     # res
        pl.BlockSpec(memory_space=pl.ANY),                   # cache_k (in place)
        pl.BlockSpec(memory_space=pl.ANY),                   # cache_v (in place)
    ]
    out_shape = (
        jax.ShapeDtypeStruct((t, HIDDEN), hidden_states.dtype),
        jax.ShapeDtypeStruct((t, HIDDEN), hidden_states.dtype),
        jax.ShapeDtypeStruct(cache_k.shape, cache_k.dtype),
        jax.ShapeDtypeStruct(cache_v.shape, cache_v.dtype),
    )

    output, res, new_k, new_v = pl.pallas_call(
        kernel,
        out_shape=out_shape,
        in_specs=in_specs,
        out_specs=out_specs,
        scratch_shapes=[
            pltpu.VMEM((t, KV_SIZE), cache_k.dtype),
            pltpu.VMEM((t, KV_SIZE), cache_v.dtype),
            pltpu.SemaphoreType.DMA((2, t)),
        ],
        input_output_aliases={11: 2, 12: 3},   # kv-cache updated in place (P8)
    )(hidden_states, residual, weights["ln_w"], weights["w_qkv_t"],
      weights["w_o_t"], weights["w_gate_up_t"], weights["w_down_t"],
      rope_cos, rope_sin, weights["pswap"], slots, cache_k, cache_v)

    # process_group.size() == 1 -> no all_reduce
    # TODO(synk): use_qk_norm (CohereLayerNorm on q/k) not exercised (config off).
    # TODO(synk): LoRA adapter_data paths and the decode-time paged attention
    # over block_tables are not modeled (prefill causal path only).
    return (output, res), (new_k, new_v)


# ---------------- deterministic parameters ----------------
def make_params(key):
    keys = jax.random.split(key, 5)
    scale = 0.02
    w_qkv = scale * jax.random.normal(keys[0], (QKV_SIZE, HIDDEN), jnp.float32)
    w_o = scale * jax.random.normal(keys[1], (HIDDEN, Q_SIZE), jnp.float32)
    w_gate_up = scale * jax.random.normal(keys[2], (2 * INTERMEDIATE, HIDDEN), jnp.float32)
    w_down = scale * jax.random.normal(keys[3], (HIDDEN, INTERMEDIATE), jnp.float32)
    ln_w = 1.0 + 0.1 * jax.random.normal(keys[4], (HIDDEN,), jnp.float32)
    return {"w_qkv": w_qkv, "w_o": w_o, "w_gate_up": w_gate_up,
            "w_down": w_down, "ln_w": ln_w}


def prepare_weights(params):
    """One-time prep: pre-transpose to [in, out], cast to bf16, and build the
    constant pair-swap permutation used by the interleaved rotary."""
    idx = jnp.arange(QK_SIZE, dtype=jnp.int32)
    pswap = (idx[:, None] == (idx[None, :] ^ 1)).astype(jnp.float32)
    return {
        "ln_w": params["ln_w"].astype(jnp.float32).reshape(1, HIDDEN),
        "w_qkv_t": params["w_qkv"].T.astype(ACT_DTYPE),
        "w_o_t": params["w_o"].T.astype(ACT_DTYPE),
        "w_gate_up_t": params["w_gate_up"].T.astype(ACT_DTYPE),
        "w_down_t": params["w_down"].T.astype(ACT_DTYPE),
        "pswap": pswap,
    }


if __name__ == "__main__":
    root = jax.random.PRNGKey(0)
    k_x, k_res, k_p = jax.random.split(root, 3)

    hidden_states = jax.random.normal(k_x, (T, HIDDEN), ACT_DTYPE)
    residual = jax.random.normal(k_res, (T, HIDDEN), ACT_DTYPE)
    weights = prepare_weights(make_params(k_p))

    # rotary tables (rope_theta = 10000), interleaved-pair convention
    inv_freq = 1.0 / (10000.0 ** (jnp.arange(0, HEAD_SIZE, 2, dtype=jnp.float32) / HEAD_SIZE))
    pos = jnp.arange(T, dtype=jnp.float32)
    freqs = pos[:, None] * inv_freq[None, :]          # [T, HEAD_SIZE // 2]
    cos = jnp.cos(freqs)
    sin = jnp.sin(freqs)

    cache_k = jnp.zeros((NUM_SLOTS, KV_SIZE), CACHE_DTYPE)
    cache_v = jnp.zeros((NUM_SLOTS, KV_SIZE), CACHE_DTYPE)
    slots = jnp.arange(T, dtype=jnp.int32)

    (output, res), (new_k, new_v) = flash_cohere_layer(
        hidden_states, residual, cos, sin, cache_k, cache_v, slots, weights)
    jax.block_until_ready((output, res, new_k, new_v))

    assert output.shape == (T, HIDDEN)
    assert res.shape == (T, HIDDEN)
    assert new_k.shape == cache_k.shape and new_v.shape == cache_v.shape
    assert bool(jnp.all(jnp.isfinite(output.astype(jnp.float32))))
    expected_res = hidden_states.astype(jnp.float32) + residual.astype(jnp.float32)
    assert bool(jnp.allclose(res.astype(jnp.float32), expected_res, atol=5e-2, rtol=5e-2))
    assert bool(jnp.any(jnp.abs(new_k[:T]) > 0))      # cache rows got written
    assert bool(jnp.all(new_k[T:] == 0))              # untouched rows preserved
    print("KERNEL_OK")
</pallas_src>

<mosaic_0001>
module attributes {stable_mosaic.version = 11 : i64} {
  func.func @cohere_layer_kernel(%arg0: memref<8x64xbf16, #tpu.memory_space<vmem>>, %arg1: memref<8x64xbf16, #tpu.memory_space<vmem>>, %arg2: memref<1x64xf32, #tpu.memory_space<vmem>>, %arg3: memref<64x128xbf16, #tpu.memory_space<vmem>>, %arg4: memref<64x64xbf16, #tpu.memory_space<vmem>>, %arg5: memref<64x256xbf16, #tpu.memory_space<vmem>>, %arg6: memref<128x64xbf16, #tpu.memory_space<vmem>>, %arg7: memref<8x96xf32, #tpu.memory_space<vmem>>, %arg8: memref<8x96xf32, #tpu.memory_space<vmem>>, %arg9: memref<96x96xf32, #tpu.memory_space<vmem>>, %arg10: memref<8xi32, #tpu.memory_space<smem>>, %arg11: memref<16x32xf32, #tpu.memory_space<any>>, %arg12: memref<16x32xf32, #tpu.memory_space<any>>, %arg13: memref<8x64xbf16, #tpu.memory_space<vmem>>, %arg14: memref<8x64xbf16, #tpu.memory_space<vmem>>, %arg15: memref<16x32xf32, #tpu.memory_space<any>>, %arg16: memref<16x32xf32, #tpu.memory_space<any>>, %arg17: memref<8x32xf32, #tpu.memory_space<vmem>>, %arg18: memref<8x32xf32, #tpu.memory_space<vmem>>, %arg19: memref<2x8x!tpu.dma_semaphore, #tpu.memory_space<semaphore_mem>>) attributes {dimension_semantics = [], scalar_prefetch = 0 : i64, scratch_operands = 3 : i64, tpu.core_type = #tpu.core_type<tc>} {
    %c0 = arith.constant 0 : index
    %c0_0 = arith.constant 0 : index
    %0 = vector.load %arg0[%c0, %c0_0] : memref<8x64xbf16, #tpu.memory_space<vmem>>, vector<8x64xbf16>
    %1 = arith.extf %0 : vector<8x64xbf16> to vector<8x64xf32>
    %c0_1 = arith.constant 0 : index
    %c0_2 = arith.constant 0 : index
    %2 = vector.load %arg1[%c0_1, %c0_2] : memref<8x64xbf16, #tpu.memory_space<vmem>>, vector<8x64xbf16>
    %3 = arith.extf %2 : vector<8x64xbf16> to vector<8x64xf32>
    %4 = arith.addf %1, %3 : vector<8x64xf32>
    %5 = arith.truncf %4 : vector<8x64xf32> to vector<8x64xbf16>
    %c0_3 = arith.constant 0 : index
    %c0_4 = arith.constant 0 : index
    %6 = vector.load %arg14[%c0_3, %c0_4] : memref<8x64xbf16, #tpu.memory_space<vmem>>, vector<8x64xbf16>
    tpu.vector_store %arg14[%c0_3, %c0_4], %5 {strides = array<i32>} : memref<8x64xbf16, #tpu.memory_space<vmem>>, vector<8x64xbf16>,
    %cst = arith.constant dense<0.000000e+00> : vector<8xf32>
    %7 = vector.multi_reduction <add>, %4, %cst [1] : vector<8x64xf32> to vector<8xf32>
    %8 = vector.shape_cast %7 : vector<8xf32> to vector<8x1xf32>
    %cst_5 = arith.constant 6.400000e+01 : f32
    %9 = vector.broadcast %cst_5 : f32 to vector<8x1xf32>
    %10 = arith.divf %8, %9 : vector<8x1xf32>
    %11 = vector.broadcast %10 : vector<8x1xf32> to vector<8x64xf32>
    %12 = arith.subf %4, %11 : vector<8x64xf32>
    %13 = arith.mulf %12, %12 : vector<8x64xf32>
    %cst_6 = arith.constant dense<0.000000e+00> : vector<8xf32>
    %14 = vector.multi_reduction <add>, %13, %cst_6 [1] : vector<8x64xf32> to vector<8xf32>
    %15 = vector.shape_cast %14 : vector<8xf32> to vector<8x1xf32>
    %cst_7 = arith.constant 6.400000e+01 : f32
    %16 = vector.broadcast %cst_7 : f32 to vector<8x1xf32>
    %17 = arith.divf %15, %16 : vector<8x1xf32>
    %cst_8 = arith.constant 9.99999974E-6 : f32
    %18 = vector.broadcast %cst_8 : f32 to vector<8x1xf32>
    %19 = arith.addf %17, %18 : vector<8x1xf32>
    %20 = math.rsqrt %19 : vector<8x1xf32>
    %21 = vector.broadcast %20 : vector<8x1xf32> to vector<8x64xf32>
    %22 = arith.mulf %12, %21 : vector<8x64xf32>
    %c0_9 = arith.constant 0 : index
    %c0_10 = arith.constant 0 : index
    %23 = vector.load %arg2[%c0_9, %c0_10] : memref<1x64xf32, #tpu.memory_space<vmem>>, vector<1x64xf32>
    %24 = vector.broadcast %23 : vector<1x64xf32> to vector<8x64xf32>
    %25 = arith.mulf %22, %24 : vector<8x64xf32>
    %26 = arith.truncf %25 : vector<8x64xf32> to vector<8x64xbf16>
    %c0_11 = arith.constant 0 : index
    %c0_12 = arith.constant 0 : index
    %27 = vector.load %arg3[%c0_11, %c0_12] : memref<64x128xbf16, #tpu.memory_space<vmem>>, vector<64x128xbf16>
    %cst_13 = arith.constant dense<0.000000e+00> : vector<8x128xf32>
    %28 = tpu.matmul %26, %27, %cst_13 {dimension_numbers = #tpu.dot_dimension_numbers<[1], [0], [0], [1], [0, 0, 1, 1], [], []>} : vector<8x64xbf16>, vector<64x128xbf16>, vector<8x128xf32> -> vector<8x128xf32>
    %29 = vector.extract_strided_slice %28 {offsets = [0, 0], sizes = [8, 96], strides = [1, 1]} : vector<8x128xf32> to vector<8x96xf32>
    %30 = vector.extract_strided_slice %28 {offsets = [0, 96], sizes = [8, 32], strides = [1, 1]} : vector<8x128xf32> to vector<8x32xf32>
    %c0_14 = arith.constant 0 : index
    %c0_15 = arith.constant 0 : index
    %31 = vector.load %arg9[%c0_14, %c0_15] : memref<96x96xf32, #tpu.memory_space<vmem>>, vector<96x96xf32>
    %cst_16 = arith.constant dense<0.000000e+00> : vector<8x96xf32>
    %32 = tpu.matmul %29, %31, %cst_16 {dimension_numbers = #tpu.dot_dimension_numbers<[1], [0], [0], [1], [0, 0, 1, 1], [], []>} : vector<8x96xf32>, vector<96x96xf32>, vector<8x96xf32> -> vector<8x96xf32>
    %c0_17 = arith.constant 0 : index
    %c0_18 = arith.constant 0 : index
    %33 = vector.load %arg7[%c0_17, %c0_18] : memref<8x96xf32, #tpu.memory_space<vmem>>, vector<8x96xf32>
    %34 = arith.mulf %29, %33 : vector<8x96xf32>
    %c0_19 = arith.constant 0 : index
    %c0_20 = arith.constant 0 : index
    %35 = vector.load %arg8[%c0_19, %c0_20] : memref<8x96xf32, #tpu.memory_space<vmem>>, vector<8x96xf32>
    %36 = arith.mulf %32, %35 : vector<8x96xf32>
    %37 = arith.addf %34, %36 : vector<8x96xf32>
    %38 = vector.extract_strided_slice %37 {offsets = [0, 64], sizes = [8, 32], strides = [1, 1]} : vector<8x96xf32> to vector<8x32xf32>
    %c0_21 = arith.constant 0 : index
    %c0_22 = arith.constant 0 : index
    %39 = vector.load %arg17[%c0_21, %c0_22] : memref<8x32xf32, #tpu.memory_space<vmem>>, vector<8x32xf32>
    tpu.vector_store %arg17[%c0_21, %c0_22], %38 {strides = array<i32>} : memref<8x32xf32, #tpu.memory_space<vmem>>, vector<8x32xf32>,
    %c0_23 = arith.constant 0 : index
    %c0_24 = arith.constant 0 : index
    %40 = vector.load %arg18[%c0_23, %c0_24] : memref<8x32xf32, #tpu.memory_space<vmem>>, vector<8x32xf32>
    tpu.vector_store %arg18[%c0_23, %c0_24], %30 {strides = array<i32>} : memref<8x32xf32, #tpu.memory_space<vmem>>, vector<8x32xf32>,
    %c0_25 = arith.constant 0 : index
    %41 = memref.load %arg10[%c0_25] : memref<8xi32, #tpu.memory_space<smem>>
    %c0_i32 = arith.constant 0 : i32
    %c0_i32_26 = arith.constant 0 : i32
    %c0_i32_27 = arith.constant 0 : i32
    %c0_i32_28 = arith.constant 0 : i32
    %42 = tpu.memref_slice %arg17[%c0_i32_27, %c0_i32_28] : memref<8x32xf32, #tpu.memory_space<vmem>> -> memref<1x32xf32, #tpu.memory_space<vmem>>
    %c0_i32_29 = arith.constant 0 : i32
    %43 = tpu.memref_slice %arg15[%41, %c0_i32_29] : memref<16x32xf32, #tpu.memory_space<any>> -> memref<1x32xf32, #tpu.memory_space<any>>
    %44 = tpu.memref_slice %arg19[%c0_i32, %c0_i32_26] : memref<2x8x!tpu.dma_semaphore, #tpu.memory_space<semaphore_mem>> -> memref<1x1x!tpu.dma_semaphore, #tpu.memory_space<semaphore_mem>>
    %45 = tpu.memref_squeeze %44 : memref<1x1x!tpu.dma_semaphore, #tpu.memory_space<semaphore_mem>> -> memref<!tpu.dma_semaphore, #tpu.memory_space<semaphore_mem>>
    tpu.enqueue_dma source(%42 : memref<1x32xf32, #tpu.memory_space<vmem>>) target(%43 : memref<1x32xf32, #tpu.memory_space<any>>) target_semaphore(%45 : memref<!tpu.dma_semaphore, #tpu.memory_space<semaphore_mem>>)
    %c1_i32 = arith.constant 1 : i32
    %c0_i32_30 = arith.constant 0 : i32
    %c0_i32_31 = arith.constant 0 : i32
    %c0_i32_32 = arith.constant 0 : i32
    %46 = tpu.memref_slice %arg18[%c0_i32_31, %c0_i32_32] : memref<8x32xf32, #tpu.memory_space<vmem>> -> memref<1x32xf32, #tpu.memory_space<vmem>>
    %c0_i32_33 = arith.constant 0 : i32
    %47 = tpu.memref_slice %arg16[%41, %c0_i32_33] : memref<16x32xf32, #tpu.memory_space<any>> -> memref<1x32xf32, #tpu.memory_space<any>>
    %48 = tpu.memref_slice %arg19[%c1_i32, %c0_i32_30] : memref<2x8x!tpu.dma_semaphore, #tpu.memory_space<semaphore_mem>> -> memref<1x1x!tpu.dma_semaphore, #tpu.memory_space<semaphore_mem>>
    %49 = tpu.memref_squeeze %48 : memref<1x1x!tpu.dma_semaphore, #tpu.memory_space<semaphore_mem>> -> memref<!tpu.dma_semaphore, #tpu.memory_space<semaphore_mem>>
    tpu.enqueue_dma source(%46 : memref<1x32xf32, #tpu.memory_space<vmem>>) target(%47 : memref<1x32xf32, #tpu.memory_space<any>>) target_semaphore(%49 : memref<!tpu.dma_semaphore, #tpu.memory_space<semaphore_mem>>)
    %c1 = arith.constant 1 : index
    %50 = memref.load %arg10[%c1] : memref<8xi32, #tpu.memory_space<smem>>
    %c0_i32_34 = arith.constant 0 : i32
    %c1_i32_35 = arith.constant 1 : i32
    %c1_i32_36 = arith.constant 1 : i32
    %c0_i32_37 = arith.constant 0 : i32
    %51 = tpu.memref_slice %arg17[%c1_i32_36, %c0_i32_37] : memref<8x32xf32, #tpu.memory_space<vmem>> -> memref<1x32xf32, #tpu.memory_space<vmem>>
    %c0_i32_38 = arith.constant 0 : i32
    %52 = tpu.memref_slice %arg15[%50, %c0_i32_38] : memref<16x32xf32, #tpu.memory_space<any>> -> memref<1x32xf32, #tpu.memory_space<any>>
    %53 = tpu.memref_slice %arg19[%c0_i32_34, %c1_i32_35] : memref<2x8x!tpu.dma_semaphore, #tpu.memory_space<semaphore_mem>> -> memref<1x1x!tpu.dma_semaphore, #tpu.memory_space<semaphore_mem>>
    %54 = tpu.memref_squeeze %53 : memref<1x1x!tpu.dma_semaphore, #tpu.memory_space<semaphore_mem>> -> memref<!tpu.dma_semaphore, #tpu.memory_space<semaphore_mem>>
    tpu.enqueue_dma source(%51 : memref<1x32xf32, #tpu.memory_space<vmem>>) target(%52 : memref<1x32xf32, #tpu.memory_space<any>>) target_semaphore(%54 : memref<!tpu.dma_semaphore, #tpu.memory_space<semaphore_mem>>)
    %c1_i32_39 = arith.constant 1 : i32
    %c1_i32_40 = arith.constant 1 : i32
    %c1_i32_41 = arith.constant 1 : i32
    %c0_i32_42 = arith.constant 0 : i32
    %55 = tpu.memref_slice %arg18[%c1_i32_41, %c0_i32_42] : memref<8x32xf32, #tpu.memory_space<vmem>> -> memref<1x32xf32, #tpu.memory_space<vmem>>
    %c0_i32_43 = arith.constant 0 : i32
    %56 = tpu.memref_slice %arg16[%50, %c0_i32_43] : memref<16x32xf32, #tpu.memory_space<any>> -> memref<1x32xf32, #tpu.memory_space<any>>
    %57 = tpu.memref_slice %arg19[%c1_i32_39, %c1_i32_40] : memref<2x8x!tpu.dma_semaphore, #tpu.memory_space<semaphore_mem>> -> memref<1x1x!tpu.dma_semaphore, #tpu.memory_space<semaphore_mem>>
    %58 = tpu.memref_squeeze %57 : memref<1x1x!tpu.dma_semaphore, #tpu.memory_space<semaphore_mem>> -> memref<!tpu.dma_semaphore, #tpu.memory_space<semaphore_mem>>
    tpu.enqueue_dma source(%55 : memref<1x32xf32, #tpu.memory_space<vmem>>) target(%56 : memref<1x32xf32, #tpu.memory_space<any>>) target_semaphore(%58 : memref<!tpu.dma_semaphore, #tpu.memory_space<semaphore_mem>>)
    %c2 = arith.constant 2 : index
    %59 = memref.load %arg10[%c2] : memref<8xi32, #tpu.memory_space<smem>>
    %c0_i32_44 = arith.constant 0 : i32
    %c2_i32 = arith.constant 2 : i32
    %c2_i32_45 = arith.constant 2 : i32
    %c0_i32_46 = arith.constant 0 : i32
    %60 = tpu.memref_slice %arg17[%c2_i32_45, %c0_i32_46] : memref<8x32xf32, #tpu.memory_space<vmem>> -> memref<1x32xf32, #tpu.memory_space<vmem>>
    %c0_i32_47 = arith.constant 0 : i32
    %61 = tpu.memref_slice %arg15[%59, %c0_i32_47] : memref<16x32xf32, #tpu.memory_space<any>> -> memref<1x32xf32, #tpu.memory_space<any>>
    %62 = tpu.memref_slice %arg19[%c0_i32_44, %c2_i32] : memref<2x8x!tpu.dma_semaphore, #tpu.memory_space<semaphore_mem>> -> memref<1x1x!tpu.dma_semaphore, #tpu.memory_space<semaphore_mem>>
    %63 = tpu.memref_squeeze %62 : memref<1x1x!tpu.dma_semaphore, #tpu.memory_space<semaphore_mem>> -> memref<!tpu.dma_semaphore, #tpu.memory_space<semaphore_mem>>
    tpu.enqueue_dma source(%60 : memref<1x32xf32, #tpu.memory_space<vmem>>) target(%61 : memref<1x32xf32, #tpu.memory_space<any>>) target_semaphore(%63 : memref<!tpu.dma_semaphore, #tpu.memory_space<semaphore_mem>>)
    %c1_i32_48 = arith.constant 1 : i32
    %c2_i32_49 = arith.constant 2 : i32
    %c2_i32_50 = arith.constant 2 : i32
    %c0_i32_51 = arith.constant 0 : i32
    %64 = tpu.memref_slice %arg18[%c2_i32_50, %c0_i32_51] : memref<8x32xf32, #tpu.memory_space<vmem>> -> memref<1x32xf32, #tpu.memory_space<vmem>>
    %c0_i32_52 = arith.constant 0 : i32
    %65 = tpu.memref_slice %arg16[%59, %c0_i32_52] : memref<16x32xf32, #tpu.memory_space<any>> -> memref<1x32xf32, #tpu.memory_space<any>>
    %66 = tpu.memref_slice %arg19[%c1_i32_48, %c2_i32_49] : memref<2x8x!tpu.dma_semaphore, #tpu.memory_space<semaphore_mem>> -> memref<1x1x!tpu.dma_semaphore, #tpu.memory_space<semaphore_mem>>
    %67 = tpu.memref_squeeze %66 : memref<1x1x!tpu.dma_semaphore, #tpu.memory_space<semaphore_mem>> -> memref<!tpu.dma_semaphore, #tpu.memory_space<semaphore_mem>>
    tpu.enqueue_dma source(%64 : memref<1x32xf32, #tpu.memory_space<vmem>>) target(%65 : memref<1x32xf32, #tpu.memory_space<any>>) target_semaphore(%67 : memref<!tpu.dma_semaphore, #tpu.memory_space<semaphore_mem>>)
    %c3 = arith.constant 3 : index
    %68 = memref.load %arg10[%c3] : memref<8xi32, #tpu.memory_space<smem>>
    %c0_i32_53 = arith.constant 0 : i32
    %c3_i32 = arith.constant 3 : i32
    %c3_i32_54 = arith.constant 3 : i32
    %c0_i32_55 = arith.constant 0 : i32
    %69 = tpu.memref_slice %arg17[%c3_i32_54, %c0_i32_55] : memref<8x32xf32, #tpu.memory_space<vmem>> -> memref<1x32xf32, #tpu.memory_space<vmem>>
    %c0_i32_56 = arith.constant 0 : i32
    %70 = tpu.memref_slice %arg15[%68, %c0_i32_56] : memref<16x32xf32, #tpu.memory_space<any>> -> memref<1x32xf32, #tpu.memory_space<any>>
    %71 = tpu.memref_slice %arg19[%c0_i32_53, %c3_i32] : memref<2x8x!tpu.dma_semaphore, #tpu.memory_space<semaphore_mem>> -> memref<1x1x!tpu.dma_semaphore, #tpu.memory_space<semaphore_mem>>
    %72 = tpu.memref_squeeze %71 : memref<1x1x!tpu.dma_semaphore, #tpu.memory_space<semaphore_mem>> -> memref<!tpu.dma_semaphore, #tpu.memory_space<semaphore_mem>>
    tpu.enqueue_dma source(%69 : memref<1x32xf32, #tpu.memory_space<vmem>>) target(%70 : memref<1x32xf32, #tpu.memory_space<any>>) target_semaphore(%72 : memref<!tpu.dma_semaphore, #tpu.memory_space<semaphore_mem>>)
    %c1_i32_57 = arith.constant 1 : i32
    %c3_i32_58 = arith.constant 3 : i32
    %c3_i32_59 = arith.constant 3 : i32
    %c0_i32_60 = arith.constant 0 : i32
    %73 = tpu.memref_slice %arg18[%c3_i32_59, %c0_i32_60] : memref<8x32xf32, #tpu.memory_space<vmem>> -> memref<1x32xf32, #tpu.memory_space<vmem>>
    %c0_i32_61 = arith.constant 0 : i32
    %74 = tpu.memref_slice %arg16[%68, %c0_i32_61] : memref<16x32xf32, #tpu.memory_space<any>> -> memref<1x32xf32, #tpu.memory_space<any>>
    %75 = tpu.memref_slice %arg19[%c1_i32_57, %c3_i32_58] : memref<2x8x!tpu.dma_semaphore, #tpu.memory_space<semaphore_mem>> -> memref<1x1x!tpu.dma_semaphore, #tpu.memory_space<semaphore_mem>>
    %76 = tpu.memref_squeeze %75 : memref<1x1x!tpu.dma_semaphore, #tpu.memory_space<semaphore_mem>> -> memref<!tpu.dma_semaphore, #tpu.memory_space<semaphore_mem>>
    tpu.enqueue_dma source(%73 : memref<1x32xf32, #tpu.memory_space<vmem>>) target(%74 : memref<1x32xf32, #tpu.memory_space<any>>) target_semaphore(%76 : memref<!tpu.dma_semaphore, #tpu.memory_space<semaphore_mem>>)
    %c4 = arith.constant 4 : index
    %77 = memref.load %arg10[%c4] : memref<8xi32, #tpu.memory_space<smem>>
    %c0_i32_62 = arith.constant 0 : i32
    %c4_i32 = arith.constant 4 : i32
    %c4_i32_63 = arith.constant 4 : i32
    %c0_i32_64 = arith.constant 0 : i32
    %78 = tpu.memref_slice %arg17[%c4_i32_63, %c0_i32_64] : memref<8x32xf32, #tpu.memory_space<vmem>> -> memref<1x32xf32, #tpu.memory_space<vmem>>
    %c0_i32_65 = arith.constant 0 : i32
    %79 = tpu.memref_slice %arg15[%77, %c0_i32_65] : memref<16x32xf32, #tpu.memory_space<any>> -> memref<1x32xf32, #tpu.memory_space<any>>
    %80 = tpu.memref_slice %arg19[%c0_i32_62, %c4_i32] : memref<2x8x!tpu.dma_semaphore, #tpu.memory_space<semaphore_mem>> -> memref<1x1x!tpu.dma_semaphore, #tpu.memory_space<semaphore_mem>>
    %81 = tpu.memref_squeeze %80 : memref<1x1x!tpu.dma_semaphore, #tpu.memory_space<semaphore_mem>> -> memref<!tpu.dma_semaphore, #tpu.memory_space<semaphore_mem>>
    tpu.enqueue_dma source(%78 : memref<1x32xf32, #tpu.memory_space<vmem>>) target(%79 : memref<1x32xf32, #tpu.memory_space<any>>) target_semaphore(%81 : memref<!tpu.dma_semaphore, #tpu.memory_space<semaphore_mem>>)
    %c1_i32_66 = arith.constant 1 : i32
    %c4_i32_67 = arith.constant 4 : i32
    %c4_i32_68 = arith.constant 4 : i32
    %c0_i32_69 = arith.constant 0 : i32
    %82 = tpu.memref_slice %arg18[%c4_i32_68, %c0_i32_69] : memref<8x32xf32, #tpu.memory_space<vmem>> -> memref<1x32xf32, #tpu.memory_space<vmem>>
    %c0_i32_70 = arith.constant 0 : i32
    %83 = tpu.memref_slice %arg16[%77, %c0_i32_70] : memref<16x32xf32, #tpu.memory_space<any>> -> memref<1x32xf32, #tpu.memory_space<any>>
    %84 = tpu.memref_slice %arg19[%c1_i32_66, %c4_i32_67] : memref<2x8x!tpu.dma_semaphore, #tpu.memory_space<semaphore_mem>> -> memref<1x1x!tpu.dma_semaphore, #tpu.memory_space<semaphore_mem>>
    %85 = tpu.memref_squeeze %84 : memref<1x1x!tpu.dma_semaphore, #tpu.memory_space<semaphore_mem>> -> memref<!tpu.dma_semaphore, #tpu.memory_space<semaphore_mem>>
    tpu.enqueue_dma source(%82 : memref<1x32xf32, #tpu.memory_space<vmem>>) target(%83 : memref<1x32xf32, #tpu.memory_space<any>>) target_semaphore(%85 : memref<!tpu.dma_semaphore, #tpu.memory_space<semaphore_mem>>)
    %c5 = arith.constant 5 : index
    %86 = memref.load %arg10[%c5] : memref<8xi32, #tpu.memory_space<smem>>
    %c0_i32_71 = arith.constant 0 : i32
    %c5_i32 = arith.constant 5 : i32
    %c5_i32_72 = arith.constant 5 : i32
    %c0_i32_73 = arith.constant 0 : i32
    %87 = tpu.memref_slice %arg17[%c5_i32_72, %c0_i32_73] : memref<8x32xf32, #tpu.memory_space<vmem>> -> memref<1x32xf32, #tpu.memory_space<vmem>>
    %c0_i32_74 = arith.constant 0 : i32
    %88 = tpu.memref_slice %arg15[%86, %c0_i32_74] : memref<16x32xf32, #tpu.memory_space<any>> -> memref<1x32xf32, #tpu.memory_space<any>>
    %89 = tpu.memref_slice %arg19[%c0_i32_71, %c5_i32] : memref<2x8x!tpu.dma_semaphore, #tpu.memory_space<semaphore_mem>> -> memref<1x1x!tpu.dma_semaphore, #tpu.memory_space<semaphore_mem>>
    %90 = tpu.memref_squeeze %89 : memref<1x1x!tpu.dma_semaphore, #tpu.memory_space<semaphore_mem>> -> memref<!tpu.dma_semaphore, #tpu.memory_space<semaphore_mem>>
    tpu.enqueue_dma source(%87 : memref<1x32xf32, #tpu.memory_space<vmem>>) target(%88 : memref<1x32xf32, #tpu.memory_space<any>>) target_semaphore(%90 : memref<!tpu.dma_semaphore, #tpu.memory_space<semaphore_mem>>)
    %c1_i32_75 = arith.constant 1 : i32
    %c5_i32_76 = arith.constant 5 : i32
    %c5_i32_77 = arith.constant 5 : i32
    %c0_i32_78 = arith.constant 0 : i32
    %91 = tpu.memref_slice %arg18[%c5_i32_77, %c0_i32_78] : memref<8x32xf32, #tpu.memory_space<vmem>> -> memref<1x32xf32, #tpu.memory_space<vmem>>
    %c0_i32_79 = arith.constant 0 : i32
    %92 = tpu.memref_slice %arg16[%86, %c0_i32_79] : memref<16x32xf32, #tpu.memory_space<any>> -> memref<1x32xf32, #tpu.memory_space<any>>
    %93 = tpu.memref_slice %arg19[%c1_i32_75, %c5_i32_76] : memref<2x8x!tpu.dma_semaphore, #tpu.memory_space<semaphore_mem>> -> memref<1x1x!tpu.dma_semaphore, #tpu.memory_space<semaphore_mem>>
    %94 = tpu.memref_squeeze %93 : memref<1x1x!tpu.dma_semaphore, #tpu.memory_space<semaphore_mem>> -> memref<!tpu.dma_semaphore, #tpu.memory_space<semaphore_mem>>
    tpu.enqueue_dma source(%91 : memref<1x32xf32, #tpu.memory_space<vmem>>) target(%92 : memref<1x32xf32, #tpu.memory_space<any>>) target_semaphore(%94 : memref<!tpu.dma_semaphore, #tpu.memory_space<semaphore_mem>>)
    %c6 = arith.constant 6 : index
    %95 = memref.load %arg10[%c6] : memref<8xi32, #tpu.memory_space<smem>>
    %c0_i32_80 = arith.constant 0 : i32
    %c6_i32 = arith.constant 6 : i32
    %c6_i32_81 = arith.constant 6 : i32
    %c0_i32_82 = arith.constant 0 : i32
    %96 = tpu.memref_slice %arg17[%c6_i32_81, %c0_i32_82] : memref<8x32xf32, #tpu.memory_space<vmem>> -> memref<1x32xf32, #tpu.memory_space<vmem>>
    %c0_i32_83 = arith.constant 0 : i32
    %97 = tpu.memref_slice %arg15[%95, %c0_i32_83] : memref<16x32xf32, #tpu.memory_space<any>> -> memref<1x32xf32, #tpu.memory_space<any>>
    %98 = tpu.memref_slice %arg19[%c0_i32_80, %c6_i32] : memref<2x8x!tpu.dma_semaphore, #tpu.memory_space<semaphore_mem>> -> memref<1x1x!tpu.dma_semaphore, #tpu.memory_space<semaphore_mem>>
    %99 = tpu.memref_squeeze %98 : memref<1x1x!tpu.dma_semaphore, #tpu.memory_space<semaphore_mem>> -> memref<!tpu.dma_semaphore, #tpu.memory_space<semaphore_mem>>
    tpu.enqueue_dma source(%96 : memref<1x32xf32, #tpu.memory_space<vmem>>) target(%97 : memref<1x32xf32, #tpu.memory_space<any>>) target_semaphore(%99 : memref<!tpu.dma_semaphore, #tpu.memory_space<semaphore_mem>>)
    %c1_i32_84 = arith.constant 1 : i32
    %c6_i32_85 = arith.constant 6 : i32
    %c6_i32_86 = arith.constant 6 : i32
    %c0_i32_87 = arith.constant 0 : i32
    %100 = tpu.memref_slice %arg18[%c6_i32_86, %c0_i32_87] : memref<8x32xf32, #tpu.memory_space<vmem>> -> memref<1x32xf32, #tpu.memory_space<vmem>>
    %c0_i32_88 = arith.constant 0 : i32
    %101 = tpu.memref_slice %arg16[%95, %c0_i32_88] : memref<16x32xf32, #tpu.memory_space<any>> -> memref<1x32xf32, #tpu.memory_space<any>>
    %102 = tpu.memref_slice %arg19[%c1_i32_84, %c6_i32_85] : memref<2x8x!tpu.dma_semaphore, #tpu.memory_space<semaphore_mem>> -> memref<1x1x!tpu.dma_semaphore, #tpu.memory_space<semaphore_mem>>
    %103 = tpu.memref_squeeze %102 : memref<1x1x!tpu.dma_semaphore, #tpu.memory_space<semaphore_mem>> -> memref<!tpu.dma_semaphore, #tpu.memory_space<semaphore_mem>>
    tpu.enqueue_dma source(%100 : memref<1x32xf32, #tpu.memory_space<vmem>>) target(%101 : memref<1x32xf32, #tpu.memory_space<any>>) target_semaphore(%103 : memref<!tpu.dma_semaphore, #tpu.memory_space<semaphore_mem>>)
    %c7 = arith.constant 7 : index
    %104 = memref.load %arg10[%c7] : memref<8xi32, #tpu.memory_space<smem>>
    %c0_i32_89 = arith.constant 0 : i32
    %c7_i32 = arith.constant 7 : i32
    %c7_i32_90 = arith.constant 7 : i32
    %c0_i32_91 = arith.constant 0 : i32
    %105 = tpu.memref_slice %arg17[%c7_i32_90, %c0_i32_91] : memref<8x32xf32, #tpu.memory_space<vmem>> -> memref<1x32xf32, #tpu.memory_space<vmem>>
    %c0_i32_92 = arith.constant 0 : i32
    %106 = tpu.memref_slice %arg15[%104, %c0_i32_92] : memref<16x32xf32, #tpu.memory_space<any>> -> memref<1x32xf32, #tpu.memory_space<any>>
    %107 = tpu.memref_slice %arg19[%c0_i32_89, %c7_i32] : memref<2x8x!tpu.dma_semaphore, #tpu.memory_space<semaphore_mem>> -> memref<1x1x!tpu.dma_semaphore, #tpu.memory_space<semaphore_mem>>
    %108 = tpu.memref_squeeze %107 : memref<1x1x!tpu.dma_semaphore, #tpu.memory_space<semaphore_mem>> -> memref<!tpu.dma_semaphore, #tpu.memory_space<semaphore_mem>>
    tpu.enqueue_dma source(%105 : memref<1x32xf32, #tpu.memory_space<vmem>>) target(%106 : memref<1x32xf32, #tpu.memory_space<any>>) target_semaphore(%108 : memref<!tpu.dma_semaphore, #tpu.memory_space<semaphore_mem>>)
    %c1_i32_93 = arith.constant 1 : i32
    %c7_i32_94 = arith.constant 7 : i32
    %c7_i32_95 = arith.constant 7 : i32
    %c0_i32_96 = arith.constant 0 : i32
    %109 = tpu.memref_slice %arg18[%c7_i32_95, %c0_i32_96] : memref<8x32xf32, #tpu.memory_space<vmem>> -> memref<1x32xf32, #tpu.memory_space<vmem>>
    %c0_i32_97 = arith.constant 0 : i32
    %110 = tpu.memref_slice %arg16[%104, %c0_i32_97] : memref<16x32xf32, #tpu.memory_space<any>> -> memref<1x32xf32, #tpu.memory_space<any>>
    %111 = tpu.memref_slice %arg19[%c1_i32_93, %c7_i32_94] : memref<2x8x!tpu.dma_semaphore, #tpu.memory_space<semaphore_mem>> -> memref<1x1x!tpu.dma_semaphore, #tpu.memory_space<semaphore_mem>>
    %112 = tpu.memref_squeeze %111 : memref<1x1x!tpu.dma_semaphore, #tpu.memory_space<semaphore_mem>> -> memref<!tpu.dma_semaphore, #tpu.memory_space<semaphore_mem>>
    tpu.enqueue_dma source(%109 : memref<1x32xf32, #tpu.memory_space<vmem>>) target(%110 : memref<1x32xf32, #tpu.memory_space<any>>) target_semaphore(%112 : memref<!tpu.dma_semaphore, #tpu.memory_space<semaphore_mem>>)
    %113 = tpu.iota {dimensions = array<i32: 0>} : vector<8x8xi32>
    %114 = tpu.iota {dimensions = array<i32: 1>} : vector<8x8xi32>
    %115 = arith.cmpi sle, %114, %113 : vector<8x8xi32>
    %c0_98 = arith.constant 0 : index
    %c0_99 = arith.constant 0 : index
    %116 = vector.load %arg4[%c0_98, %c0_99] : memref<64x64xbf16, #tpu.memory_space<vmem>>, vector<64x64xbf16>
    %cst_100 = arith.constant 0.000000e+00 : f32
    %117 = vector.broadcast %cst_100 : f32 to vector<8x64xf32>
    %118 = vector.extract_strided_slice %37 {offsets = [0, 0], sizes = [8, 16], strides = [1, 1]} : vector<8x96xf32> to vector<8x16xf32>
    %119 = vector.extract_strided_slice %37 {offsets = [0, 64], sizes = [8, 16], strides = [1, 1]} : vector<8x96xf32> to vector<8x16xf32>
    %120 = vector.extract_strided_slice %30 {offsets = [0, 0], sizes = [8, 16], strides = [1, 1]} : vector<8x32xf32> to vector<8x16xf32>
    %cst_101 = arith.constant dense<0.000000e+00> : vector<8x8xf32>
    %121 = tpu.matmul %118, %119, %cst_101 {dimension_numbers = #tpu.dot_dimension_numbers<[1], [1], [0], [0], [0, 0, 1, 0], [], []>} : vector<8x16xf32>, vector<8x16xf32>, vector<8x8xf32> -> vector<8x8xf32>
    %cst_102 = arith.constant 2.500000e-01 : f32
    %122 = vector.broadcast %cst_102 : f32 to vector<8x8xf32>
    %123 = arith.mulf %121, %122 : vector<8x8xf32>
    %cst_103 = arith.constant -1.000000e+30 : f32
    %124 = vector.broadcast %cst_103 : f32 to vector<8x8xf32>
    %125 = arith.select %115, %123, %124 : vector<8x8xi1>, vector<8x8xf32>
    %cst_104 = arith.constant dense<0xFF800000> : vector<8xf32>
    %126 = vector.multi_reduction <maximumf>, %125, %cst_104 [1] : vector<8x8xf32> to vector<8xf32>
    %127 = vector.shape_cast %126 : vector<8xf32> to vector<8x1xf32>
    %128 = vector.broadcast %127 : vector<8x1xf32> to vector<8x8xf32>
    %129 = arith.subf %125, %128 : vector<8x8xf32>
    %130 = math.exp %129 : vector<8x8xf32>
    %cst_105 = arith.constant dense<0.000000e+00> : vector<8xf32>
    %131 = vector.multi_reduction <add>, %130, %cst_105 [1] : vector<8x8xf32> to vector<8xf32>
    %132 = vector.shape_cast %131 : vector<8xf32> to vector<8x1xf32>
    %133 = tpu.reciprocal %132 {approx = true} : vector<8x1xf32> -> vector<8x1xf32>
    %134 = vector.broadcast %133 : vector<8x1xf32> to vector<8x8xf32>
    %135 = arith.mulf %130, %134 : vector<8x8xf32>
    %136 = arith.truncf %135 : vector<8x8xf32> to vector<8x8xbf16>
    %137 = arith.truncf %120 : vector<8x16xf32> to vector<8x16xbf16>
    %cst_106 = arith.constant dense<0.000000e+00> : vector<8x16xf32>
    %138 = tpu.matmul %136, %137, %cst_106 {dimension_numbers = #tpu.dot_dimension_numbers<[1], [0], [0], [1], [0, 0, 1, 1], [], []>} : vector<8x8xbf16>, vector<8x16xbf16>, vector<8x16xf32> -> vector<8x16xf32>
    %139 = arith.truncf %138 : vector<8x16xf32> to vector<8x16xbf16>
    %140 = vector.extract_strided_slice %116 {offsets = [0, 0], sizes = [16, 64], strides = [1, 1]} : vector<64x64xbf16> to vector<16x64xbf16>
    %cst_107 = arith.constant dense<0.000000e+00> : vector<8x64xf32>
    %141 = tpu.matmul %139, %140, %cst_107 {dimension_numbers = #tpu.dot_dimension_numbers<[1], [0], [0], [1], [0, 0, 1, 1], [], []>} : vector<8x16xbf16>, vector<16x64xbf16>, vector<8x64xf32> -> vector<8x64xf32>
    %142 = arith.addf %117, %141 : vector<8x64xf32>
    %143 = vector.extract_strided_slice %37 {offsets = [0, 16], sizes = [8, 16], strides = [1, 1]} : vector<8x96xf32> to vector<8x16xf32>
    %144 = vector.extract_strided_slice %37 {offsets = [0, 64], sizes = [8, 16], strides = [1, 1]} : vector<8x96xf32> to vector<8x16xf32>
    %145 = vector.extract_strided_slice %30 {offsets = [0, 0], sizes = [8, 16], strides = [1, 1]} : vector<8x32xf32> to vector<8x16xf32>
    %cst_108 = arith.constant dense<0.000000e+00> : vector<8x8xf32>
    %146 = tpu.matmul %143, %144, %cst_108 {dimension_numbers = #tpu.dot_dimension_numbers<[1], [1], [0], [0], [0, 0, 1, 0], [], []>} : vector<8x16xf32>, vector<8x16xf32>, vector<8x8xf32> -> vector<8x8xf32>
    %cst_109 = arith.constant 2.500000e-01 : f32
    %147 = vector.broadcast %cst_109 : f32 to vector<8x8xf32>
    %148 = arith.mulf %146, %147 : vector<8x8xf32>
    %cst_110 = arith.constant -1.000000e+30 : f32
    %149 = vector.broadcast %cst_110 : f32 to vector<8x8xf32>
    %150 = arith.select %115, %148, %149 : vector<8x8xi1>, vector<8x8xf32>
    %cst_111 = arith.constant dense<0xFF800000> : vector<8xf32>
    %151 = vector.multi_reduction <maximumf>, %150, %cst_111 [1] : vector<8x8xf32> to vector<8xf32>
    %152 = vector.shape_cast %151 : vector<8xf32> to vector<8x1xf32>
    %153 = vector.broadcast %152 : vector<8x1xf32> to vector<8x8xf32>
    %154 = arith.subf %150, %153 : vector<8x8xf32>
    %155 = math.exp %154 : vector<8x8xf32>
    %cst_112 = arith.constant dense<0.000000e+00> : vector<8xf32>
    %156 = vector.multi_reduction <add>, %155, %cst_112 [1] : vector<8x8xf32> to vector<8xf32>
    %157 = vector.shape_cast %156 : vector<8xf32> to vector<8x1xf32>
    %158 = tpu.reciprocal %157 {approx = true} : vector<8x1xf32> -> vector<8x1xf32>
    %159 = vector.broadcast %158 : vector<8x1xf32> to vector<8x8xf32>
    %160 = arith.mulf %155, %159 : vector<8x8xf32>
    %161 = arith.truncf %160 : vector<8x8xf32> to vector<8x8xbf16>
    %162 = arith.truncf %145 : vector<8x16xf32> to vector<8x16xbf16>
    %cst_113 = arith.constant dense<0.000000e+00> : vector<8x16xf32>
    %163 = tpu.matmul %161, %162, %cst_113 {dimension_numbers = #tpu.dot_dimension_numbers<[1], [0], [0], [1], [0, 0, 1, 1], [], []>} : vector<8x8xbf16>, vector<8x16xbf16>, vector<8x16xf32> -> vector<8x16xf32>
    %164 = arith.truncf %163 : vector<8x16xf32> to vector<8x16xbf16>
    %165 = vector.extract_strided_slice %116 {offsets = [16, 0], sizes = [16, 64], strides = [1, 1]} : vector<64x64xbf16> to vector<16x64xbf16>
    %cst_114 = arith.constant dense<0.000000e+00> : vector<8x64xf32>
    %166 = tpu.matmul %164, %165, %cst_114 {dimension_numbers = #tpu.dot_dimension_numbers<[1], [0], [0], [1], [0, 0, 1, 1], [], []>} : vector<8x16xbf16>, vector<16x64xbf16>, vector<8x64xf32> -> vector<8x64xf32>
    %167 = arith.addf %142, %166 : vector<8x64xf32>
    %168 = vector.extract_strided_slice %37 {offsets = [0, 32], sizes = [8, 16], strides = [1, 1]} : vector<8x96xf32> to vector<8x16xf32>
    %169 = vector.extract_strided_slice %37 {offsets = [0, 80], sizes = [8, 16], strides = [1, 1]} : vector<8x96xf32> to vector<8x16xf32>
    %170 = vector.extract_strided_slice %30 {offsets = [0, 16], sizes = [8, 16], strides = [1, 1]} : vector<8x32xf32> to vector<8x16xf32>
    %cst_115 = arith.constant dense<0.000000e+00> : vector<8x8xf32>
    %171 = tpu.matmul %168, %169, %cst_115 {dimension_numbers = #tpu.dot_dimension_numbers<[1], [1], [0], [0], [0, 0, 1, 0], [], []>} : vector<8x16xf32>, vector<8x16xf32>, vector<8x8xf32> -> vector<8x8xf32>
    %cst_116 = arith.constant 2.500000e-01 : f32
    %172 = vector.broadcast %cst_116 : f32 to vector<8x8xf32>
    %173 = arith.mulf %171, %172 : vector<8x8xf32>
    %cst_117 = arith.constant -1.000000e+30 : f32
    %174 = vector.broadcast %cst_117 : f32 to vector<8x8xf32>
    %175 = arith.select %115, %173, %174 : vector<8x8xi1>, vector<8x8xf32>
    %cst_118 = arith.constant dense<0xFF800000> : vector<8xf32>
    %176 = vector.multi_reduction <maximumf>, %175, %cst_118 [1] : vector<8x8xf32> to vector<8xf32>
    %177 = vector.shape_cast %176 : vector<8xf32> to vector<8x1xf32>
    %178 = vector.broadcast %177 : vector<8x1xf32> to vector<8x8xf32>
    %179 = arith.subf %175, %178 : vector<8x8xf32>
    %180 = math.exp %179 : vector<8x8xf32>
    %cst_119 = arith.constant dense<0.000000e+00> : vector<8xf32>
    %181 = vector.multi_reduction <add>, %180, %cst_119 [1] : vector<8x8xf32> to vector<8xf32>
    %182 = vector.shape_cast %181 : vector<8xf32> to vector<8x1xf32>
    %183 = tpu.reciprocal %182 {approx = true} : vector<8x1xf32> -> vector<8x1xf32>
    %184 = vector.broadcast %183 : vector<8x1xf32> to vector<8x8xf32>
    %185 = arith.mulf %180, %184 : vector<8x8xf32>
    %186 = arith.truncf %185 : vector<8x8xf32> to vector<8x8xbf16>
    %187 = arith.truncf %170 : vector<8x16xf32> to vector<8x16xbf16>
    %cst_120 = arith.constant dense<0.000000e+00> : vector<8x16xf32>
    %188 = tpu.matmul %186, %187, %cst_120 {dimension_numbers = #tpu.dot_dimension_numbers<[1], [0], [0], [1], [0, 0, 1, 1], [], []>} : vector<8x8xbf16>, vector<8x16xbf16>, vector<8x16xf32> -> vector<8x16xf32>
    %189 = arith.truncf %188 : vector<8x16xf32> to vector<8x16xbf16>
    %190 = vector.extract_strided_slice %116 {offsets = [32, 0], sizes = [16, 64], strides = [1, 1]} : vector<64x64xbf16> to vector<16x64xbf16>
    %cst_121 = arith.constant dense<0.000000e+00> : vector<8x64xf32>
    %191 = tpu.matmul %189, %190, %cst_121 {dimension_numbers = #tpu.dot_dimension_numbers<[1], [0], [0], [1], [0, 0, 1, 1], [], []>} : vector<8x16xbf16>, vector<16x64xbf16>, vector<8x64xf32> -> vector<8x64xf32>
    %192 = arith.addf %167, %191 : vector<8x64xf32>
    %193 = vector.extract_strided_slice %37 {offsets = [0, 48], sizes = [8, 16], strides = [1, 1]} : vector<8x96xf32> to vector<8x16xf32>
    %194 = vector.extract_strided_slice %37 {offsets = [0, 80], sizes = [8, 16], strides = [1, 1]} : vector<8x96xf32> to vector<8x16xf32>
    %195 = vector.extract_strided_slice %30 {offsets = [0, 16], sizes = [8, 16], strides = [1, 1]} : vector<8x32xf32> to vector<8x16xf32>
    %cst_122 = arith.constant dense<0.000000e+00> : vector<8x8xf32>
    %196 = tpu.matmul %193, %194, %cst_122 {dimension_numbers = #tpu.dot_dimension_numbers<[1], [1], [0], [0], [0, 0, 1, 0], [], []>} : vector<8x16xf32>, vector<8x16xf32>, vector<8x8xf32> -> vector<8x8xf32>
    %cst_123 = arith.constant 2.500000e-01 : f32
    %197 = vector.broadcast %cst_123 : f32 to vector<8x8xf32>
    %198 = arith.mulf %196, %197 : vector<8x8xf32>
    %cst_124 = arith.constant -1.000000e+30 : f32
    %199 = vector.broadcast %cst_124 : f32 to vector<8x8xf32>
    %200 = arith.select %115, %198, %199 : vector<8x8xi1>, vector<8x8xf32>
    %cst_125 = arith.constant dense<0xFF800000> : vector<8xf32>
    %201 = vector.multi_reduction <maximumf>, %200, %cst_125 [1] : vector<8x8xf32> to vector<8xf32>
    %202 = vector.shape_cast %201 : vector<8xf32> to vector<8x1xf32>
    %203 = vector.broadcast %202 : vector<8x1xf32> to vector<8x8xf32>
    %204 = arith.subf %200, %203 : vector<8x8xf32>
    %205 = math.exp %204 : vector<8x8xf32>
    %cst_126 = arith.constant dense<0.000000e+00> : vector<8xf32>
    %206 = vector.multi_reduction <add>, %205, %cst_126 [1] : vector<8x8xf32> to vector<8xf32>
    %207 = vector.shape_cast %206 : vector<8xf32> to vector<8x1xf32>
    %208 = tpu.reciprocal %207 {approx = true} : vector<8x1xf32> -> vector<8x1xf32>
    %209 = vector.broadcast %208 : vector<8x1xf32> to vector<8x8xf32>
    %210 = arith.mulf %205, %209 : vector<8x8xf32>
    %211 = arith.truncf %210 : vector<8x8xf32> to vector<8x8xbf16>
    %212 = arith.truncf %195 : vector<8x16xf32> to vector<8x16xbf16>
    %cst_127 = arith.constant dense<0.000000e+00> : vector<8x16xf32>
    %213 = tpu.matmul %211, %212, %cst_127 {dimension_numbers = #tpu.dot_dimension_numbers<[1], [0], [0], [1], [0, 0, 1, 1], [], []>} : vector<8x8xbf16>, vector<8x16xbf16>, vector<8x16xf32> -> vector<8x16xf32>
    %214 = arith.truncf %213 : vector<8x16xf32> to vector<8x16xbf16>
    %215 = vector.extract_strided_slice %116 {offsets = [48, 0], sizes = [16, 64], strides = [1, 1]} : vector<64x64xbf16> to vector<16x64xbf16>
    %cst_128 = arith.constant dense<0.000000e+00> : vector<8x64xf32>
    %216 = tpu.matmul %214, %215, %cst_128 {dimension_numbers = #tpu.dot_dimension_numbers<[1], [0], [0], [1], [0, 0, 1, 1], [], []>} : vector<8x16xbf16>, vector<16x64xbf16>, vector<8x64xf32> -> vector<8x64xf32>
    %217 = arith.addf %192, %216 : vector<8x64xf32>
    %c0_129 = arith.constant 0 : index
    %c0_130 = arith.constant 0 : index
    %218 = vector.load %arg5[%c0_129, %c0_130] : memref<64x256xbf16, #tpu.memory_space<vmem>>, vector<64x256xbf16>
    %cst_131 = arith.constant dense<0.000000e+00> : vector<8x256xf32>
    %219 = tpu.matmul %26, %218, %cst_131 {dimension_numbers = #tpu.dot_dimension_numbers<[1], [0], [0], [1], [0, 0, 1, 1], [], []>} : vector<8x64xbf16>, vector<64x256xbf16>, vector<8x256xf32> -> vector<8x256xf32>
    %220 = vector.extract_strided_slice %219 {offsets = [0, 0], sizes = [8, 128], strides = [1, 1]} : vector<8x256xf32> to vector<8x128xf32>
    %221 = arith.negf %220 : vector<8x128xf32>
    %222 = math.exp %221 : vector<8x128xf32>
    %cst_132 = arith.constant 1.000000e+00 : f32
    %223 = vector.broadcast %cst_132 : f32 to vector<8x128xf32>
    %224 = arith.addf %223, %222 : vector<8x128xf32>
    %225 = arith.divf %223, %224 : vector<8x128xf32>
    %226 = arith.mulf %220, %225 : vector<8x128xf32>
    %227 = vector.extract_strided_slice %219 {offsets = [0, 128], sizes = [8, 128], strides = [1, 1]} : vector<8x256xf32> to vector<8x128xf32>
    %228 = arith.mulf %226, %227 : vector<8x128xf32>
    %229 = arith.truncf %228 : vector<8x128xf32> to vector<8x128xbf16>
    %c0_133 = arith.constant 0 : index
    %c0_134 = arith.constant 0 : index
    %230 = vector.load %arg6[%c0_133, %c0_134] : memref<128x64xbf16, #tpu.memory_space<vmem>>, vector<128x64xbf16>
    %cst_135 = arith.constant dense<0.000000e+00> : vector<8x64xf32>
    %231 = tpu.matmul %229, %230, %cst_135 {dimension_numbers = #tpu.dot_dimension_numbers<[1], [0], [0], [1], [0, 0, 1, 1], [], []>} : vector<8x128xbf16>, vector<128x64xbf16>, vector<8x64xf32> -> vector<8x64xf32>
    %232 = arith.addf %217, %231 : vector<8x64xf32>
    %233 = arith.truncf %232 : vector<8x64xf32> to vector<8x64xbf16>
    %c0_136 = arith.constant 0 : index
    %c0_137 = arith.constant 0 : index
    %234 = vector.load %arg13[%c0_136, %c0_137] : memref<8x64xbf16, #tpu.memory_space<vmem>>, vector<8x64xbf16>
    tpu.vector_store %arg13[%c0_136, %c0_137], %233 {strides = array<i32>} : memref<8x64xbf16, #tpu.memory_space<vmem>>, vector<8x64xbf16>,
    %c0_i32_138 = arith.constant 0 : i32
    %c0_i32_139 = arith.constant 0 : i32
    %c0_i32_140 = arith.constant 0 : i32
    %c0_i32_141 = arith.constant 0 : i32
    %235 = tpu.memref_slice %arg17[%c0_i32_140, %c0_i32_141] : memref<8x32xf32, #tpu.memory_space<vmem>> -> memref<1x32xf32, #tpu.memory_space<vmem>>
    %c0_i32_142 = arith.constant 0 : i32
    %236 = tpu.memref_slice %arg15[%41, %c0_i32_142] : memref<16x32xf32, #tpu.memory_space<any>> -> memref<1x32xf32, #tpu.memory_space<any>>
    %237 = tpu.memref_slice %arg19[%c0_i32_138, %c0_i32_139] : memref<2x8x!tpu.dma_semaphore, #tpu.memory_space<semaphore_mem>> -> memref<1x1x!tpu.dma_semaphore, #tpu.memory_space<semaphore_mem>>
    %238 = tpu.memref_squeeze %237 : memref<1x1x!tpu.dma_semaphore, #tpu.memory_space<semaphore_mem>> -> memref<!tpu.dma_semaphore, #tpu.memory_space<semaphore_mem>>
    tpu.wait_dma2 semaphore(%238 : memref<!tpu.dma_semaphore, #tpu.memory_space<semaphore_mem>>) src(%235 : memref<1x32xf32, #tpu.memory_space<vmem>>) dst(%236 : memref<1x32xf32, #tpu.memory_space<any>>)
    %c1_i32_143 = arith.constant 1 : i32
    %c0_i32_144 = arith.constant 0 : i32
    %c0_i32_145 = arith.constant 0 : i32
    %c0_i32_146 = arith.constant 0 : i32
    %239 = tpu.memref_slice %arg18[%c0_i32_145, %c0_i32_146] : memref<8x32xf32, #tpu.memory_space<vmem>> -> memref<1x32xf32, #tpu.memory_space<vmem>>
    %c0_i32_147 = arith.constant 0 : i32
    %240 = tpu.memref_slice %arg16[%41, %c0_i32_147] : memref<16x32xf32, #tpu.memory_space<any>> -> memref<1x32xf32, #tpu.memory_space<any>>
    %241 = tpu.memref_slice %arg19[%c1_i32_143, %c0_i32_144] : memref<2x8x!tpu.dma_semaphore, #tpu.memory_space<semaphore_mem>> -> memref<1x1x!tpu.dma_semaphore, #tpu.memory_space<semaphore_mem>>
    %242 = tpu.memref_squeeze %241 : memref<1x1x!tpu.dma_semaphore, #tpu.memory_space<semaphore_mem>> -> memref<!tpu.dma_semaphore, #tpu.memory_space<semaphore_mem>>
    tpu.wait_dma2 semaphore(%242 : memref<!tpu.dma_semaphore, #tpu.memory_space<semaphore_mem>>) src(%239 : memref<1x32xf32, #tpu.memory_space<vmem>>) dst(%240 : memref<1x32xf32, #tpu.memory_space<any>>)
    %c0_i32_148 = arith.constant 0 : i32
    %c1_i32_149 = arith.constant 1 : i32
    %c1_i32_150 = arith.constant 1 : i32
    %c0_i32_151 = arith.constant 0 : i32
    %243 = tpu.memref_slice %arg17[%c1_i32_150, %c0_i32_151] : memref<8x32xf32, #tpu.memory_space<vmem>> -> memref<1x32xf32, #tpu.memory_space<vmem>>
    %c0_i32_152 = arith.constant 0 : i32
    %244 = tpu.memref_slice %arg15[%50, %c0_i32_152] : memref<16x32xf32, #tpu.memory_space<any>> -> memref<1x32xf32, #tpu.memory_space<any>>
    %245 = tpu.memref_slice %arg19[%c0_i32_148, %c1_i32_149] : memref<2x8x!tpu.dma_semaphore, #tpu.memory_space<semaphore_mem>> -> memref<1x1x!tpu.dma_semaphore, #tpu.memory_space<semaphore_mem>>
    %246 = tpu.memref_squeeze %245 : memref<1x1x!tpu.dma_semaphore, #tpu.memory_space<semaphore_mem>> -> memref<!tpu.dma_semaphore, #tpu.memory_space<semaphore_mem>>
    tpu.wait_dma2 semaphore(%246 : memref<!tpu.dma_semaphore, #tpu.memory_space<semaphore_mem>>) src(%243 : memref<1x32xf32, #tpu.memory_space<vmem>>) dst(%244 : memref<1x32xf32, #tpu.memory_space<any>>)
    %c1_i32_153 = arith.constant 1 : i32
    %c1_i32_154 = arith.constant 1 : i32
    %c1_i32_155 = arith.constant 1 : i32
    %c0_i32_156 = arith.constant 0 : i32
    %247 = tpu.memref_slice %arg18[%c1_i32_155, %c0_i32_156] : memref<8x32xf32, #tpu.memory_space<vmem>> -> memref<1x32xf32, #tpu.memory_space<vmem>>
    %c0_i32_157 = arith.constant 0 : i32
    %248 = tpu.memref_slice %arg16[%50, %c0_i32_157] : memref<16x32xf32, #tpu.memory_space<any>> -> memref<1x32xf32, #tpu.memory_space<any>>
    %249 = tpu.memref_slice %arg19[%c1_i32_153, %c1_i32_154] : memref<2x8x!tpu.dma_semaphore, #tpu.memory_space<semaphore_mem>> -> memref<1x1x!tpu.dma_semaphore, #tpu.memory_space<semaphore_mem>>
    %250 = tpu.memref_squeeze %249 : memref<1x1x!tpu.dma_semaphore, #tpu.memory_space<semaphore_mem>> -> memref<!tpu.dma_semaphore, #tpu.memory_space<semaphore_mem>>
    tpu.wait_dma2 semaphore(%250 : memref<!tpu.dma_semaphore, #tpu.memory_space<semaphore_mem>>) src(%247 : memref<1x32xf32, #tpu.memory_space<vmem>>) dst(%248 : memref<1x32xf32, #tpu.memory_space<any>>)
    %c0_i32_158 = arith.constant 0 : i32
    %c2_i32_159 = arith.constant 2 : i32
    %c2_i32_160 = arith.constant 2 : i32
    %c0_i32_161 = arith.constant 0 : i32
    %251 = tpu.memref_slice %arg17[%c2_i32_160, %c0_i32_161] : memref<8x32xf32, #tpu.memory_space<vmem>> -> memref<1x32xf32, #tpu.memory_space<vmem>>
    %c0_i32_162 = arith.constant 0 : i32
    %252 = tpu.memref_slice %arg15[%59, %c0_i32_162] : memref<16x32xf32, #tpu.memory_space<any>> -> memref<1x32xf32, #tpu.memory_space<any>>
    %253 = tpu.memref_slice %arg19[%c0_i32_158, %c2_i32_159] : memref<2x8x!tpu.dma_semaphore, #tpu.memory_space<semaphore_mem>> -> memref<1x1x!tpu.dma_semaphore, #tpu.memory_space<semaphore_mem>>
    %254 = tpu.memref_squeeze %253 : memref<1x1x!tpu.dma_semaphore, #tpu.memory_space<semaphore_mem>> -> memref<!tpu.dma_semaphore, #tpu.memory_space<semaphore_mem>>
    tpu.wait_dma2 semaphore(%254 : memref<!tpu.dma_semaphore, #tpu.memory_space<semaphore_mem>>) src(%251 : memref<1x32xf32, #tpu.memory_space<vmem>>) dst(%252 : memref<1x32xf32, #tpu.memory_space<any>>)
    %c1_i32_163 = arith.constant 1 : i32
    %c2_i32_164 = arith.constant 2 : i32
    %c2_i32_165 = arith.constant 2 : i32
    %c0_i32_166 = arith.constant 0 : i32
    %255 = tpu.memref_slice %arg18[%c2_i32_165, %c0_i32_166] : memref<8x32xf32, #tpu.memory_space<vmem>> -> memref<1x32xf32, #tpu.memory_space<vmem>>
    %c0_i32_167 = arith.constant 0 : i32
    %256 = tpu.memref_slice %arg16[%59, %c0_i32_167] : memref<16x32xf32, #tpu.memory_space<any>> -> memref<1x32xf32, #tpu.memory_space<any>>
    %257 = tpu.memref_slice %arg19[%c1_i32_163, %c2_i32_164] : memref<2x8x!tpu.dma_semaphore, #tpu.memory_space<semaphore_mem>> -> memref<1x1x!tpu.dma_semaphore, #tpu.memory_space<semaphore_mem>>
    %258 = tpu.memref_squeeze %257 : memref<1x1x!tpu.dma_semaphore, #tpu.memory_space<semaphore_mem>> -> memref<!tpu.dma_semaphore, #tpu.memory_space<semaphore_mem>>
    tpu.wait_dma2 semaphore(%258 : memref<!tpu.dma_semaphore, #tpu.memory_space<semaphore_mem>>) src(%255 : memref<1x32xf32, #tpu.memory_space<vmem>>) dst(%256 : memref<1x32xf32, #tpu.memory_space<any>>)
    %c0_i32_168 = arith.constant 0 : i32
    %c3_i32_169 = arith.constant 3 : i32
    %c3_i32_170 = arith.constant 3 : i32
    %c0_i32_171 = arith.constant 0 : i32
    %259 = tpu.memref_slice %arg17[%c3_i32_170, %c0_i32_171] : memref<8x32xf32, #tpu.memory_space<vmem>> -> memref<1x32xf32, #tpu.memory_space<vmem>>
    %c0_i32_172 = arith.constant 0 : i32
    %260 = tpu.memref_slice %arg15[%68, %c0_i32_172] : memref<16x32xf32, #tpu.memory_space<any>> -> memref<1x32xf32, #tpu.memory_space<any>>
    %261 = tpu.memref_slice %arg19[%c0_i32_168, %c3_i32_169] : memref<2x8x!tpu.dma_semaphore, #tpu.memory_space<semaphore_mem>> -> memref<1x1x!tpu.dma_semaphore, #tpu.memory_space<semaphore_mem>>
    %262 = tpu.memref_squeeze %261 : memref<1x1x!tpu.dma_semaphore, #tpu.memory_space<semaphore_mem>> -> memref<!tpu.dma_semaphore, #tpu.memory_space<semaphore_mem>>
    tpu.wait_dma2 semaphore(%262 : memref<!tpu.dma_semaphore, #tpu.memory_space<semaphore_mem>>) src(%259 : memref<1x32xf32, #tpu.memory_space<vmem>>) dst(%260 : memref<1x32xf32, #tpu.memory_space<any>>)
    %c1_i32_173 = arith.constant 1 : i32
    %c3_i32_174 = arith.constant 3 : i32
    %c3_i32_175 = arith.constant 3 : i32
    %c0_i32_176 = arith.constant 0 : i32
    %263 = tpu.memref_slice %arg18[%c3_i32_175, %c0_i32_176] : memref<8x32xf32, #tpu.memory_space<vmem>> -> memref<1x32xf32, #tpu.memory_space<vmem>>
    %c0_i32_177 = arith.constant 0 : i32
    %264 = tpu.memref_slice %arg16[%68, %c0_i32_177] : memref<16x32xf32, #tpu.memory_space<any>> -> memref<1x32xf32, #tpu.memory_space<any>>
    %265 = tpu.memref_slice %arg19[%c1_i32_173, %c3_i32_174] : memref<2x8x!tpu.dma_semaphore, #tpu.memory_space<semaphore_mem>> -> memref<1x1x!tpu.dma_semaphore, #tpu.memory_space<semaphore_mem>>
    %266 = tpu.memref_squeeze %265 : memref<1x1x!tpu.dma_semaphore, #tpu.memory_space<semaphore_mem>> -> memref<!tpu.dma_semaphore, #tpu.memory_space<semaphore_mem>>
    tpu.wait_dma2 semaphore(%266 : memref<!tpu.dma_semaphore, #tpu.memory_space<semaphore_mem>>) src(%263 : memref<1x32xf32, #tpu.memory_space<vmem>>) dst(%264 : memref<1x32xf32, #tpu.memory_space<any>>)
    %c0_i32_178 = arith.constant 0 : i32
    %c4_i32_179 = arith.constant 4 : i32
    %c4_i32_180 = arith.constant 4 : i32
    %c0_i32_181 = arith.constant 0 : i32
    %267 = tpu.memref_slice %arg17[%c4_i32_180, %c0_i32_181] : memref<8x32xf32, #tpu.memory_space<vmem>> -> memref<1x32xf32, #tpu.memory_space<vmem>>
    %c0_i32_182 = arith.constant 0 : i32
    %268 = tpu.memref_slice %arg15[%77, %c0_i32_182] : memref<16x32xf32, #tpu.memory_space<any>> -> memref<1x32xf32, #tpu.memory_space<any>>
    %269 = tpu.memref_slice %arg19[%c0_i32_178, %c4_i32_179] : memref<2x8x!tpu.dma_semaphore, #tpu.memory_space<semaphore_mem>> -> memref<1x1x!tpu.dma_semaphore, #tpu.memory_space<semaphore_mem>>
    %270 = tpu.memref_squeeze %269 : memref<1x1x!tpu.dma_semaphore, #tpu.memory_space<semaphore_mem>> -> memref<!tpu.dma_semaphore, #tpu.memory_space<semaphore_mem>>
    tpu.wait_dma2 semaphore(%270 : memref<!tpu.dma_semaphore, #tpu.memory_space<semaphore_mem>>) src(%267 : memref<1x32xf32, #tpu.memory_space<vmem>>) dst(%268 : memref<1x32xf32, #tpu.memory_space<any>>)
    %c1_i32_183 = arith.constant 1 : i32
    %c4_i32_184 = arith.constant 4 : i32
    %c4_i32_185 = arith.constant 4 : i32
    %c0_i32_186 = arith.constant 0 : i32
    %271 = tpu.memref_slice %arg18[%c4_i32_185, %c0_i32_186] : memref<8x32xf32, #tpu.memory_space<vmem>> -> memref<1x32xf32, #tpu.memory_space<vmem>>
    %c0_i32_187 = arith.constant 0 : i32
    %272 = tpu.memref_slice %arg16[%77, %c0_i32_187] : memref<16x32xf32, #tpu.memory_space<any>> -> memref<1x32xf32, #tpu.memory_space<any>>
    %273 = tpu.memref_slice %arg19[%c1_i32_183, %c4_i32_184] : memref<2x8x!tpu.dma_semaphore, #tpu.memory_space<semaphore_mem>> -> memref<1x1x!tpu.dma_semaphore, #tpu.memory_space<semaphore_mem>>
    %274 = tpu.memref_squeeze %273 : memref<1x1x!tpu.dma_semaphore, #tpu.memory_space<semaphore_mem>> -> memref<!tpu.dma_semaphore, #tpu.memory_space<semaphore_mem>>
    tpu.wait_dma2 semaphore(%274 : memref<!tpu.dma_semaphore, #tpu.memory_space<semaphore_mem>>) src(%271 : memref<1x32xf32, #tpu.memory_space<vmem>>) dst(%272 : memref<1x32xf32, #tpu.memory_space<any>>)
    %c0_i32_188 = arith.constant 0 : i32
    %c5_i32_189 = arith.constant 5 : i32
    %c5_i32_190 = arith.constant 5 : i32
    %c0_i32_191 = arith.constant 0 : i32
    %275 = tpu.memref_slice %arg17[%c5_i32_190, %c0_i32_191] : memref<8x32xf32, #tpu.memory_space<vmem>> -> memref<1x32xf32, #tpu.memory_space<vmem>>
    %c0_i32_192 = arith.constant 0 : i32
    %276 = tpu.memref_slice %arg15[%86, %c0_i32_192] : memref<16x32xf32, #tpu.memory_space<any>> -> memref<1x32xf32, #tpu.memory_space<any>>
    %277 = tpu.memref_slice %arg19[%c0_i32_188, %c5_i32_189] : memref<2x8x!tpu.dma_semaphore, #tpu.memory_space<semaphore_mem>> -> memref<1x1x!tpu.dma_semaphore, #tpu.memory_space<semaphore_mem>>
    %278 = tpu.memref_squeeze %277 : memref<1x1x!tpu.dma_semaphore, #tpu.memory_space<semaphore_mem>> -> memref<!tpu.dma_semaphore, #tpu.memory_space<semaphore_mem>>
    tpu.wait_dma2 semaphore(%278 : memref<!tpu.dma_semaphore, #tpu.memory_space<semaphore_mem>>) src(%275 : memref<1x32xf32, #tpu.memory_space<vmem>>) dst(%276 : memref<1x32xf32, #tpu.memory_space<any>>)
    %c1_i32_193 = arith.constant 1 : i32
    %c5_i32_194 = arith.constant 5 : i32
    %c5_i32_195 = arith.constant 5 : i32
    %c0_i32_196 = arith.constant 0 : i32
    %279 = tpu.memref_slice %arg18[%c5_i32_195, %c0_i32_196] : memref<8x32xf32, #tpu.memory_space<vmem>> -> memref<1x32xf32, #tpu.memory_space<vmem>>
    %c0_i32_197 = arith.constant 0 : i32
    %280 = tpu.memref_slice %arg16[%86, %c0_i32_197] : memref<16x32xf32, #tpu.memory_space<any>> -> memref<1x32xf32, #tpu.memory_space<any>>
    %281 = tpu.memref_slice %arg19[%c1_i32_193, %c5_i32_194] : memref<2x8x!tpu.dma_semaphore, #tpu.memory_space<semaphore_mem>> -> memref<1x1x!tpu.dma_semaphore, #tpu.memory_space<semaphore_mem>>
    %282 = tpu.memref_squeeze %281 : memref<1x1x!tpu.dma_semaphore, #tpu.memory_space<semaphore_mem>> -> memref<!tpu.dma_semaphore, #tpu.memory_space<semaphore_mem>>
    tpu.wait_dma2 semaphore(%282 : memref<!tpu.dma_semaphore, #tpu.memory_space<semaphore_mem>>) src(%279 : memref<1x32xf32, #tpu.memory_space<vmem>>) dst(%280 : memref<1x32xf32, #tpu.memory_space<any>>)
    %c0_i32_198 = arith.constant 0 : i32
    %c6_i32_199 = arith.constant 6 : i32
    %c6_i32_200 = arith.constant 6 : i32
    %c0_i32_201 = arith.constant 0 : i32
    %283 = tpu.memref_slice %arg17[%c6_i32_200, %c0_i32_201] : memref<8x32xf32, #tpu.memory_space<vmem>> -> memref<1x32xf32, #tpu.memory_space<vmem>>
    %c0_i32_202 = arith.constant 0 : i32
    %284 = tpu.memref_slice %arg15[%95, %c0_i32_202] : memref<16x32xf32, #tpu.memory_space<any>> -> memref<1x32xf32, #tpu.memory_space<any>>
    %285 = tpu.memref_slice %arg19[%c0_i32_198, %c6_i32_199] : memref<2x8x!tpu.dma_semaphore, #tpu.memory_space<semaphore_mem>> -> memref<1x1x!tpu.dma_semaphore, #tpu.memory_space<semaphore_mem>>
    %286 = tpu.memref_squeeze %285 : memref<1x1x!tpu.dma_semaphore, #tpu.memory_space<semaphore_mem>> -> memref<!tpu.dma_semaphore, #tpu.memory_space<semaphore_mem>>
    tpu.wait_dma2 semaphore(%286 : memref<!tpu.dma_semaphore, #tpu.memory_space<semaphore_mem>>) src(%283 : memref<1x32xf32, #tpu.memory_space<vmem>>) dst(%284 : memref<1x32xf32, #tpu.memory_space<any>>)
    %c1_i32_203 = arith.constant 1 : i32
    %c6_i32_204 = arith.constant 6 : i32
    %c6_i32_205 = arith.constant 6 : i32
    %c0_i32_206 = arith.constant 0 : i32
    %287 = tpu.memref_slice %arg18[%c6_i32_205, %c0_i32_206] : memref<8x32xf32, #tpu.memory_space<vmem>> -> memref<1x32xf32, #tpu.memory_space<vmem>>
    %c0_i32_207 = arith.constant 0 : i32
    %288 = tpu.memref_slice %arg16[%95, %c0_i32_207] : memref<16x32xf32, #tpu.memory_space<any>> -> memref<1x32xf32, #tpu.memory_space<any>>
    %289 = tpu.memref_slice %arg19[%c1_i32_203, %c6_i32_204] : memref<2x8x!tpu.dma_semaphore, #tpu.memory_space<semaphore_mem>> -> memref<1x1x!tpu.dma_semaphore, #tpu.memory_space<semaphore_mem>>
    %290 = tpu.memref_squeeze %289 : memref<1x1x!tpu.dma_semaphore, #tpu.memory_space<semaphore_mem>> -> memref<!tpu.dma_semaphore, #tpu.memory_space<semaphore_mem>>
    tpu.wait_dma2 semaphore(%290 : memref<!tpu.dma_semaphore, #tpu.memory_space<semaphore_mem>>) src(%287 : memref<1x32xf32, #tpu.memory_space<vmem>>) dst(%288 : memref<1x32xf32, #tpu.memory_space<any>>)
    %c0_i32_208 = arith.constant 0 : i32
    %c7_i32_209 = arith.constant 7 : i32
    %c7_i32_210 = arith.constant 7 : i32
    %c0_i32_211 = arith.constant 0 : i32
    %291 = tpu.memref_slice %arg17[%c7_i32_210, %c0_i32_211] : memref<8x32xf32, #tpu.memory_space<vmem>> -> memref<1x32xf32, #tpu.memory_space<vmem>>
    %c0_i32_212 = arith.constant 0 : i32
    %292 = tpu.memref_slice %arg15[%104, %c0_i32_212] : memref<16x32xf32, #tpu.memory_space<any>> -> memref<1x32xf32, #tpu.memory_space<any>>
    %293 = tpu.memref_slice %arg19[%c0_i32_208, %c7_i32_209] : memref<2x8x!tpu.dma_semaphore, #tpu.memory_space<semaphore_mem>> -> memref<1x1x!tpu.dma_semaphore, #tpu.memory_space<semaphore_mem>>
    %294 = tpu.memref_squeeze %293 : memref<1x1x!tpu.dma_semaphore, #tpu.memory_space<semaphore_mem>> -> memref<!tpu.dma_semaphore, #tpu.memory_space<semaphore_mem>>
    tpu.wait_dma2 semaphore(%294 : memref<!tpu.dma_semaphore, #tpu.memory_space<semaphore_mem>>) src(%291 : memref<1x32xf32, #tpu.memory_space<vmem>>) dst(%292 : memref<1x32xf32, #tpu.memory_space<any>>)
    %c1_i32_213 = arith.constant 1 : i32
    %c7_i32_214 = arith.constant 7 : i32
    %c7_i32_215 = arith.constant 7 : i32
    %c0_i32_216 = arith.constant 0 : i32
    %295 = tpu.memref_slice %arg18[%c7_i32_215, %c0_i32_216] : memref<8x32xf32, #tpu.memory_space<vmem>> -> memref<1x32xf32, #tpu.memory_space<vmem>>
    %c0_i32_217 = arith.constant 0 : i32
    %296 = tpu.memref_slice %arg16[%104, %c0_i32_217] : memref<16x32xf32, #tpu.memory_space<any>> -> memref<1x32xf32, #tpu.memory_space<any>>
    %297 = tpu.memref_slice %arg19[%c1_i32_213, %c7_i32_214] : memref<2x8x!tpu.dma_semaphore, #tpu.memory_space<semaphore_mem>> -> memref<1x1x!tpu.dma_semaphore, #tpu.memory_space<semaphore_mem>>
    %298 = tpu.memref_squeeze %297 : memref<1x1x!tpu.dma_semaphore, #tpu.memory_space<semaphore_mem>> -> memref<!tpu.dma_semaphore, #tpu.memory_space<semaphore_mem>>
    tpu.wait_dma2 semaphore(%298 : memref<!tpu.dma_semaphore, #tpu.memory_space<semaphore_mem>>) src(%295 : memref<1x32xf32, #tpu.memory_space<vmem>>) dst(%296 : memref<1x32xf32, #tpu.memory_space<any>>)
    return
  }
}

</mosaic_0001>

<llo_original>
// kernel: tile.15
$region0: #{tile.15}
  %s0 = inlined_call_operand.vmem [shape: f32[8,6,16], index: 0, kind: input, shape index: {}]
  %s1 = inlined_call_operand.vmem [shape: f32[8,96], index: 1, kind: output, shape index: {}]
  %v2 = vld [vmem:[%s0] ss:$8 sm:$0xf]
  %v3 = vld [vmem:[%s0] ss:$8 sm:$0xf0]
  %vm4 = vcmask 1047556
  %v5 = vsel %vm4, %v3, %v2
  %vm6 = vcmask 130048
  %7 = vst.msk [vmem:[%s1] sm:$0xff] %vm6, %v5
  %s8 = scalar_lea.vmem %s0, 5
  %v9 = vld [vmem:[%s8] ss:$8 sm:$0xf]
  %s10 = scalar_lea.vmem %s0, 5
  %v11 = vld [vmem:[%s10] ss:$8 sm:$0xf0]
  %vm12 = vcmask 1047556
  %v13 = vsel %vm12, %v11, %v9
  %14 = vrot.lane.b32.xlu0 %v13, 80
  %v15 = vpop.permute.xlu0 %14
  %vm16 = vcmask 786048
  %17 = vst.msk [vmem:[%s1] sm:$0xff] %vm16, %v15
  %s18 = scalar_lea.vmem %s0, 4
  %v19 = vld [vmem:[%s18] ss:$8 sm:$0xf]
  %s20 = scalar_lea.vmem %s0, 4
  %v21 = vld [vmem:[%s20] ss:$8 sm:$0xf0]
  %vm22 = vcmask 1047556
  %v23 = vsel %vm22, %v21, %v19
  %24 = vrot.lane.b32.xlu0 %v23, 64
  %v25 = vpop.permute.xlu0 %24
  %vm26 = vcmask 654848
  %27 = vst.msk [vmem:[%s1] sm:$0xff] %vm26, %v25
  %s28 = scalar_lea.vmem %s0, 3
  %v29 = vld [vmem:[%s28] ss:$8 sm:$0xf]
  %s30 = scalar_lea.vmem %s0, 3
  %v31 = vld [vmem:[%s30] ss:$8 sm:$0xf0]
  %vm32 = vcmask 1047556
  %v33 = vsel %vm32, %v31, %v29
  %34 = vrot.lane.b32.xlu0 %v33, 48
  %v35 = vpop.permute.xlu0 %34
  %vm36 = vcmask 523648
  %37 = vst.msk [vmem:[%s1] sm:$0xff] %vm36, %v35
  %s38 = scalar_lea.vmem %s0, 2
  %v39 = vld [vmem:[%s38] ss:$8 sm:$0xf]
  %s40 = scalar_lea.vmem %s0, 2
  %v41 = vld [vmem:[%s40] ss:$8 sm:$0xf0]
  %vm42 = vcmask 1047556
  %v43 = vsel %vm42, %v41, %v39
  %44 = vrot.lane.b32.xlu0 %v43, 32
  %v45 = vpop.permute.xlu0 %44
  %vm46 = vcmask 392448
  %47 = vst.msk [vmem:[%s1] sm:$0xff] %vm46, %v45
  %s48 = scalar_lea.vmem %s0, 1
  %v49 = vld [vmem:[%s48] ss:$8 sm:$0xf]
  %s50 = scalar_lea.vmem %s0, 1
  %v51 = vld [vmem:[%s50] ss:$8 sm:$0xf0]
  %vm52 = vcmask 1047556
  %v53 = vsel %vm52, %v51, %v49
  %54 = vrot.lane.b32.xlu0 %v53, 16
  %v55 = vpop.permute.xlu0 %54
  %vm56 = vcmask 261248
  %57 = vst.msk [vmem:[%s1] sm:$0xff] %vm56, %v55

// kernel: flash_cohere_layer.1
$region0: #{flash_cohere_layer.1}
  #allocation0 [shape = 'u32[]', space=smem, size = 0x4, offset = 0x4, fixed_abs, tag = 'smem constant byte address 0x4 - core index']
  #allocation1 [shape = 'u32[144,128]{1,0:T(1,128)}', space=vmem, size = 0x12000, scoped, tag = 'internal scratch']
  #allocation2 [shape = 'f32[8,32]{1,0:T(8,128)}', space=vmem, size = 0x1000, scoped, tag = 'scratch operand']
  #allocation3 [shape = 'f32[8,32]{1,0:T(8,128)}', space=vmem, size = 0x1000, scoped, tag = 'scratch operand']
  #allocation4 [shape = 's32[16]{0}', space=sflag, size = 0x40, scoped, tag = 'scratch operand']
  #allocation11 [shape = 's32[]', space=sflag, size = 0x4, offset = 0, fixed_abs, tag = 'sflag constant byte address 0x0 - dummy sync flag']
  #allocation12 [shape = 's32[]', space=sflag, size = 0x4, offset = 0, fixed_abs, tag = 'sflag constant byte address 0x0 - dummy sync flag']
  #allocation13 [shape = 'u32[]', space=smem, size = 0x4, offset = 0x44, fixed_abs, tag = 'smem constant byte address 0x44 - assertion arg 0']
  #allocation14 [shape = 'u32[]', space=smem, size = 0x4, offset = 0x48, fixed_abs, tag = 'smem constant byte address 0x48 - assertion arg 1']
  #allocation15 [shape = 's32[]', space=sflag, size = 0x4, offset = 0, fixed_abs, tag = 'sflag constant byte address 0x0 - dummy sync flag']
  #allocation16 [shape = 's32[]', space=sflag, size = 0x4, offset = 0, fixed_abs, tag = 'sflag constant byte address 0x0 - dummy sync flag']
  #allocation17 [shape = 's32[]', space=sflag, size = 0x4, offset = 0, fixed_abs, tag = 'sflag constant byte address 0x0 - dummy sync flag']
  #allocation18 [shape = 's32[]', space=sflag, size = 0x4, offset = 0, fixed_abs, tag = 'sflag constant byte address 0x0 - dummy sync flag']
  #allocation19 [shape = 's32[]', space=sflag, size = 0x4, offset = 0, fixed_abs, tag = 'sflag constant byte address 0x0 - dummy sync flag']
  #allocation20 [shape = 's32[]', space=sflag, size = 0x4, offset = 0, fixed_abs, tag = 'sflag constant byte address 0x0 - dummy sync flag']
  #allocation21 [shape = 's32[]', space=sflag, size = 0x4, offset = 0, fixed_abs, tag = 'sflag constant byte address 0x0 - dummy sync flag']
  #allocation22 [shape = 's32[]', space=sflag, size = 0x4, offset = 0, fixed_abs, tag = 'sflag constant byte address 0x0 - dummy sync flag']
  #allocation23 [shape = 's32[]', space=sflag, size = 0x4, offset = 0, fixed_abs, tag = 'sflag constant byte address 0x0 - dummy sync flag']
  #allocation24 [shape = 's32[]', space=sflag, size = 0x4, offset = 0, fixed_abs, tag = 'sflag constant byte address 0x0 - dummy sync flag']
  #allocation25 [shape = 's32[]', space=sflag, size = 0x4, offset = 0, fixed_abs, tag = 'sflag constant byte address 0x0 - dummy sync flag']
  #allocation26 [shape = 's32[]', space=sflag, size = 0x4, offset = 0, fixed_abs, tag = 'sflag constant byte address 0x0 - dummy sync flag']
  #allocation27 [shape = 's32[]', space=sflag, size = 0x4, offset = 0, fixed_abs, tag = 'sflag constant byte address 0x0 - dummy sync flag']
  #allocation28 [shape = 's32[]', space=sflag, size = 0x4, offset = 0, fixed_abs, tag = 'sflag constant byte address 0x0 - dummy sync flag']
  #allocation29 [shape = 's32[]', space=sflag, size = 0x4, offset = 0, fixed_abs, tag = 'sflag constant byte address 0x0 - dummy sync flag']
  #allocation30 [shape = 's32[]', space=sflag, size = 0x4, offset = 0, fixed_abs, tag = 'sflag constant byte address 0x0 - dummy sync flag']
  #allocation31 [shape = 's32[]', space=sflag, size = 0x4, offset = 0, fixed_abs, tag = 'sflag constant byte address 0x0 - dummy sync flag']
  #allocation32 [shape = 's32[]', space=sflag, size = 0x4, offset = 0, fixed_abs, tag = 'sflag constant byte address 0x0 - dummy sync flag']
  #allocation33 [shape = 's32[]', space=sflag, size = 0x4, offset = 0, fixed_abs, tag = 'sflag constant byte address 0x0 - dummy sync flag']
  #allocation34 [shape = 's32[]', space=sflag, size = 0x4, offset = 0, fixed_abs, tag = 'sflag constant byte address 0x0 - dummy sync flag']
  #allocation35 [shape = 's32[]', space=sflag, size = 0x4, offset = 0, fixed_abs, tag = 'sflag constant byte address 0x0 - dummy sync flag']
  #allocation36 [shape = 's32[]', space=sflag, size = 0x4, offset = 0, fixed_abs, tag = 'sflag constant byte address 0x0 - dummy sync flag']
  #allocation37 [shape = 's32[]', space=sflag, size = 0x4, offset = 0, fixed_abs, tag = 'sflag constant byte address 0x0 - dummy sync flag']
  #allocation38 [shape = 's32[]', space=sflag, size = 0x4, offset = 0, fixed_abs, tag = 'sflag constant byte address 0x0 - dummy sync flag']
  #allocation39 [shape = 's32[]', space=sflag, size = 0x4, offset = 0, fixed_abs, tag = 'sflag constant byte address 0x0 - dummy sync flag']
  #allocation40 [shape = 's32[]', space=sflag, size = 0x4, offset = 0, fixed_abs, tag = 'sflag constant byte address 0x0 - dummy sync flag']
  #allocation41 [shape = 's32[]', space=sflag, size = 0x4, offset = 0, fixed_abs, tag = 'sflag constant byte address 0x0 - dummy sync flag']
  #allocation42 [shape = 's32[]', space=sflag, size = 0x4, offset = 0, fixed_abs, tag = 'sflag constant byte address 0x0 - dummy sync flag']
  #allocation43 [shape = 's32[]', space=sflag, size = 0x4, offset = 0, fixed_abs, tag = 'sflag constant byte address 0x0 - dummy sync flag']
  #allocation44 [shape = 's32[]', space=sflag, size = 0x4, offset = 0, fixed_abs, tag = 'sflag constant byte address 0x0 - dummy sync flag']
  %s0 = inlined_call_operand.vmem [shape: bf16[8,64], index: 0, kind: input, shape index: {}]
  %s1 = inlined_call_operand.vmem [shape: bf16[8,64], index: 1, kind: input, shape index: {}]
  %s2 = inlined_call_operand.vmem [shape: f32[1,64], index: 2, kind: input, shape index: {}]
  %s3 = inlined_call_operand.vmem [shape: bf16[64,128], index: 3, kind: input, shape index: {}]
  %s4 = inlined_call_operand.vmem [shape: bf16[64,64], index: 4, kind: input, shape index: {}]
  %s5 = inlined_call_operand.vmem [shape: bf16[64,256], index: 5, kind: input, shape index: {}]
  %s6 = inlined_call_operand.vmem [shape: bf16[128,64], index: 6, kind: input, shape index: {}]
  %s7 = inlined_call_operand.vmem [shape: f32[8,96], index: 7, kind: input, shape index: {}]
  %s8 = inlined_call_operand.vmem [shape: f32[8,96], index: 8, kind: input, shape index: {}]
  %s9 = inlined_call_operand.vmem [shape: f32[96,96], index: 9, kind: input, shape index: {}]
  %s10 = inlined_call_operand.vmem [shape: s32[8], index: 10, kind: input, shape index: {}]
  %s11 = inlined_call_operand.hbm [shape: f32[16,32], index: 11, kind: input, shape index: {}, may-alias: {11,15}]
  %s12 = inlined_call_operand.hbm [shape: f32[16,32], index: 12, kind: input, shape index: {}, may-alias: {12,16}]
  %s13 = inlined_call_operand.hbm [shape: bf16[8,64], index: 13, kind: output, shape index: {0}]
  %s14 = inlined_call_operand.hbm [shape: bf16[8,64], index: 14, kind: output, shape index: {1}]
  %s15 = inlined_call_operand.hbm [shape: f32[16,32], index: 15, kind: output, shape index: {2}, may-alias: {11,15}]
  %s16 = inlined_call_operand.hbm [shape: f32[16,32], index: 16, kind: output, shape index: {3}, may-alias: {12,16}]
  %17 = xla_tuple %s13, %s14, %s15, %s16
  %s18 = sld [smem:[#allocation0]]
  $region130: #{flash_cohere_layer.1} parent=0
    _
  %s20 = ssub.s32 1, %s18
  %s21 = scalar_select 0, %s20, %s18
  $region1: #{flash_cohere_layer.1} parent=0
    #allocation5 [shape = 'u8[512]{0}', space=smem, size = 0x200, scoped, tag = 'input window, operand 10, single buffered']
    #allocation6 [shape = 's32[1]{0}', space=sflag, size = 0x4, scoped, tag = 'scoped memory for flash_cohere_layer.1']
    #allocation7 [shape = 's32[1]{0}', space=sflag, size = 0x4, scoped, tag = 'scoped memory for flash_cohere_layer.1']
    #allocation8 [shape = 'u8[2048]{0}', space=vmem, size = 0x800, scoped, tag = 'output window, operand 0, single buffered']
    #allocation9 [shape = 'u8[2048]{0}', space=vmem, size = 0x800, scoped, tag = 'output window, operand 1, single buffered']
    #allocation10 [shape = 's32[1]{0}', space=sflag, size = 0x4, scoped, tag = 'scoped memory for flash_cohere_layer.1']
    %22 = vsyncpa [#allocation7], 0
    %23 = vsyncpa [#allocation6], 0
    %24 = vsyncpa [#allocation10], 0
    // Predicated region
    $region2: #{flash_cohere_layer.1} parent=1 // pred_check
      _
    $region3: #{flash_cohere_layer.1} parent=1 // pred_check_branch
      %26 = sbr.rel (0) target = $region5
    $region4: #{flash_cohere_layer.1} parent=1 // pred_region
      _
    $region5: #{flash_cohere_layer.1} parent=1 // pred_fallthru
      _
    // Predicated region
    $region6: #{flash_cohere_layer.1} parent=1 // pred_check
      _
    $region7: #{flash_cohere_layer.1} parent=1 // pred_check_branch
      %28 = sbr.rel (0) target = $region9
    $region8: #{flash_cohere_layer.1} parent=1 // pred_region
      _
    $region9: #{flash_cohere_layer.1} parent=1 // pred_fallthru
      _
    // Predicated region
    $region10: #{flash_cohere_layer.1} parent=1 // pred_check
      _
    $region11: #{flash_cohere_layer.1} parent=1 // pred_check_branch
      %30 = sbr.rel (0) target = $region13
    $region12: #{flash_cohere_layer.1} parent=1 // pred_region
      _
    $region13: #{flash_cohere_layer.1} parent=1 // pred_fallthru
      _
    // Predicated region
    $region14: #{flash_cohere_layer.1} parent=1 // pred_check
      _
    $region15: #{flash_cohere_layer.1} parent=1 // pred_check_branch
      %32 = sbr.rel (0) target = $region17
    $region16: #{flash_cohere_layer.1} parent=1 // pred_region
      _
    $region17: #{flash_cohere_layer.1} parent=1 // pred_fallthru
      _
    // Predicated region
    $region18: #{flash_cohere_layer.1} parent=1 // pred_check
      _
    $region19: #{flash_cohere_layer.1} parent=1 // pred_check_branch
      %34 = sbr.rel (0) target = $region21
    $region20: #{flash_cohere_layer.1} parent=1 // pred_region
      _
    $region21: #{flash_cohere_layer.1} parent=1 // pred_fallthru
      _
    // Predicated region
    $region22: #{flash_cohere_layer.1} parent=1 // pred_check
      _
    $region23: #{flash_cohere_layer.1} parent=1 // pred_check_branch
      %36 = sbr.rel (0) target = $region25
    $region24: #{flash_cohere_layer.1} parent=1 // pred_region
      _
    $region25: #{flash_cohere_layer.1} parent=1 // pred_fallthru
      _
    // Predicated region
    $region26: #{flash_cohere_layer.1} parent=1 // pred_check
      _
    $region27: #{flash_cohere_layer.1} parent=1 // pred_check_branch
      %38 = sbr.rel (0) target = $region29
    $region28: #{flash_cohere_layer.1} parent=1 // pred_region
      _
    $region29: #{flash_cohere_layer.1} parent=1 // pred_fallthru
      _
    // Predicated region
    $region30: #{flash_cohere_layer.1} parent=1 // pred_check
      _
    $region31: #{flash_cohere_layer.1} parent=1 // pred_check_branch
      %40 = sbr.rel (0) target = $region33
    $region32: #{flash_cohere_layer.1} parent=1 // pred_region
      _
    $region33: #{flash_cohere_layer.1} parent=1 // pred_fallthru
      _
    // Predicated region
    $region34: #{flash_cohere_layer.1} parent=1 // pred_check
      _
    $region35: #{flash_cohere_layer.1} parent=1 // pred_check_branch
      %42 = sbr.rel (0) target = $region37
    $region36: #{flash_cohere_layer.1} parent=1 // pred_region
      _
    $region37: #{flash_cohere_layer.1} parent=1 // pred_fallthru
      _
    // Predicated region
    $region38: #{flash_cohere_layer.1} parent=1 // pred_check
      _
    $region39: #{flash_cohere_layer.1} parent=1 // pred_check_branch
      %44 = sbr.rel (0) target = $region41
    $region40: #{flash_cohere_layer.1} parent=1 // pred_region
      _
    $region41: #{flash_cohere_layer.1} parent=1 // pred_fallthru
      _
    // Predicated region
    $region42: #{flash_cohere_layer.1} parent=1 // pred_check
      _
    $region43: #{flash_cohere_layer.1} parent=1 // pred_check_branch
      %46 = sbr.rel (0) target = $region45
    $region44: #{flash_cohere_layer.1} parent=1 // pred_region
      %s48 = ssub.s32 16, 16
      %49 = vsyncadd [#allocation7], %s48
      %s51 = sshll.u32 %s10, 4
      %s52 = int_to_ptr.vmem [resolvable:$true] %s51
      %54 = dma.vmem_to_smem %s52, 16, [#allocation5], [#allocation7]
    $region45: #{flash_cohere_layer.1} parent=1 // pred_fallthru
      _
    // Predicated region
    $region46: #{flash_cohere_layer.1} parent=1 // pred_check
      _
    $region47: #{flash_cohere_layer.1} parent=1 // pred_check_branch
      %56 = sbr.rel (0) target = $region49
    $region48: #{flash_cohere_layer.1} parent=1 // pred_region
      %57 = dma.done [#allocation7], 16
    $region49: #{flash_cohere_layer.1} parent=1 // pred_fallthru
      _
    %58 = sfence
    %v60 = vld [vmem:[%s0] sm:$0xf]
    %v61 = vunpack.c.l.bf16 %v60
    %v62 = vld [vmem:[%s1] sm:$0xf]
    %v63 = vunpack.c.l.bf16 %v62
    %v64 = vadd.f32 %v61, %v63
    %v65 = vpack.c.bf16 %v64, %v64
    %vm66 = vcmask 519168
    %67 = vst.msk [vmem:[#allocation9] sm:$0xf] %vm66, %v65
    %vm68 = vcmask 523264
    %v69 = vsel %vm68, %v64, 0.0
    %70 = vadd.xlane.f32.xlu0 %v69
    %v71 = vpop.xlane.xlu0 %70
    %v72 = vrcp.pop 64.0
    %v73 = vmul.f32 %v71, %v72
    %v74 = vsub.f32 %v64, %v73
    %v75 = vmul.f32 %v74, %v74
    %v76 = vsel %vm68, %v75, 0.0
    %77 = vadd.xlane.f32.xlu0 %v76
    %v78 = vpop.xlane.xlu0 %77
    %v79 = vmul.f32 %v78, %v72
    %v80 = vadd.f32 %v79, 1e-05
    %v81 = vrsqrt.pop %v80
    %v82 = vmul.f32 %v74, %v81
    %v83 = vld [vmem:[%s2] sm:$0x1]
    %v85 = vlaneseq
    %v86 = vshrl.u32 %v85, 7
    %v87 = vsub.s32 0, %v86
    %v88 = vrot.slane %v83, %v87
    %v90 = vmul.f32 %v82, %v88
    %v91 = vpack.c.bf16 %v90, %v90
    %v92 = vld [vmem:[%s3] sm:$0xf]
    %v93 = vld [vmem:[%s3 + $0x4] sm:$0xf]
    %v94 = vld [vmem:[%s3 + $0x8] sm:$0xf]
    %v95 = vld [vmem:[%s3 + $0xc] sm:$0xf]
    %v96 = vld [vmem:[%s3 + $0x10] sm:$0xf]
    %v97 = vld [vmem:[%s3 + $0x14] sm:$0xf]
    %v98 = vld [vmem:[%s3 + $0x18] sm:$0xf]
    %v99 = vld [vmem:[%s3 + $0x1c] sm:$0xf]
    %v108 = vunpack.c.l.b16 %v92
    %v109 = vunpack.c.l.b16 %v93
    %v110 = vunpack.c.l.b16 %v94
    %v111 = vunpack.c.l.b16 %v95
    %v112 = vunpack.c.l.b16 %v96
    %v113 = vunpack.c.l.b16 %v97
    %v114 = vunpack.c.l.b16 %v98
    %v115 = vunpack.c.l.b16 %v99
    %v116 = vpack.c.b16 %v109, %v108
    %v117 = vpack.c.b16 %v111, %v110
    %v118 = vpack.c.b16 %v113, %v112
    %v119 = vpack.c.b16 %v115, %v114
    %v125 = vsel %vm68, %v91, 0
    %127 = vmatprep.subr.bf16.mxu0 0
    %128 = vmatpush1.bf16.msra.mxu0 %v116
    %129 = vmatprep.subr.bf16.mxu0 0
    %130 = vmatpush1.bf16.msra.mxu0 %v117
    %131 = vmatprep.subr.bf16.mxu0 0
    %132 = vmatpush1.bf16.msra.mxu0 %v118
    %133 = vmatprep.subr.bf16.mxu0 0
    %134 = vmatpush1.bf16.msra.mxu0 %v119
    %135 = vmatprep.subr.bf16.mxu0 0
    %136 = vmatpush1.bf16.msra.mxu0 0
    %137 = vmatprep.subr.bf16.mxu0 0
    %138 = vmatpush1.bf16.msra.mxu0 0
    %139 = vmatprep.subr.bf16.mxu0 0
    %140 = vmatpush1.bf16.msra.mxu0 0
    %141 = vmatprep.subr.bf16.mxu0 0
    %142 = vmatpush1.bf16.msra.mxu0 0
    %143 = vmatprep.subr.bf16.mxu0 0
    %144 = vmatpush1.bf16.msra.mxu0 0
    %145 = vmatprep.subr.bf16.mxu0 0
    %146 = vmatpush1.bf16.msra.mxu0 0
    %147 = vmatprep.subr.bf16.mxu0 0
    %148 = vmatpush1.bf16.msra.mxu0 0
    %149 = vmatprep.subr.bf16.mxu0 0
    %150 = vmatpush1.bf16.msra.mxu0 0
    %151 = vmatprep.subr.bf16.mxu0 0
    %152 = vmatpush1.bf16.msra.mxu0 0
    %153 = vmatprep.subr.bf16.mxu0 0
    %154 = vmatpush1.bf16.msra.mxu0 0
    %155 = vmatprep.subr.bf16.mxu0 0
    %156 = vmatpush1.bf16.msra.mxu0 0
    %157 = vmatprep.subr.bf16.mxu0 0
    %158 = vmatpush1.bf16.msra.mxu0 0
    %159 = vmatprep.mubr.bf16.mxu0 0
    %160 = vmatmul.mubr.bf16.gmra.mrb[0].mxu0 %v125
    %v161 = vpop.f32.mrb[0].mxu0
    %v162 = vadd.f32 0.0, %v161
    %v163 = vpop.f32.mrb[0].mxu0
    %v164 = vpop.f32.mrb[0].mxu0
    %v165 = vpop.f32.mrb[0].mxu0
    %166 = vdwg.mxu0
    %v167 = vld [vmem:[%s9] sm:$0xff]
    %v168 = vld [vmem:[%s9 + $0x8] sm:$0xff]
    %v169 = vld [vmem:[%s9 + $0x10] sm:$0xff]
    %v170 = vld [vmem:[%s9 + $0x18] sm:$0xff]
    %v171 = vld [vmem:[%s9 + $0x20] sm:$0xff]
    %v172 = vld [vmem:[%s9 + $0x28] sm:$0xff]
    %v173 = vld [vmem:[%s9 + $0x30] sm:$0xff]
    %v174 = vld [vmem:[%s9 + $0x38] sm:$0xff]
    %v175 = vld [vmem:[%s9 + $0x40] sm:$0xff]
    %v176 = vld [vmem:[%s9 + $0x48] sm:$0xff]
    %v177 = vld [vmem:[%s9 + $0x50] sm:$0xff]
    %v178 = vld [vmem:[%s9 + $0x58] sm:$0xff]
    %vm179 = vcmask 785408
    %v181 = vsel %vm179, %v162, 0
    %183 = vmatprep.subr.mxu0 0.0
    %184 = vmatpush1.msra.mxu0 %v167
    %185 = vmatprep.subr.mxu0 0.0
    %186 = vmatpush1.msra.mxu0 %v168
    %187 = vmatprep.subr.mxu0 0.0
    %188 = vmatpush1.msra.mxu0 %v169
    %189 = vmatprep.subr.mxu0 0.0
    %190 = vmatpush1.msra.mxu0 %v170
    %191 = vmatprep.subr.mxu0 0.0
    %192 = vmatpush1.msra.mxu0 %v171
    %193 = vmatprep.subr.mxu0 0.0
    %194 = vmatpush1.msra.mxu0 %v172
    %195 = vmatprep.subr.mxu0 0.0
    %196 = vmatpush1.msra.mxu0 %v173
    %197 = vmatprep.subr.mxu0 0.0
    %198 = vmatpush1.msra.mxu0 %v174
    %199 = vmatprep.subr.mxu0 0.0
    %200 = vmatpush1.msra.mxu0 %v175
    %201 = vmatprep.subr.mxu0 0.0
    %202 = vmatpush1.msra.mxu0 %v176
    %203 = vmatprep.subr.mxu0 0.0
    %204 = vmatpush1.msra.mxu0 %v177
    %205 = vmatprep.subr.mxu0 0.0
    %206 = vmatpush1.msra.mxu0 %v178
    %207 = vmatprep.subr.mxu0 0.0
    %208 = vmatpush1.msra.mxu0 0.0
    %209 = vmatprep.subr.mxu0 0.0
    %210 = vmatpush1.msra.mxu0 0.0
    %211 = vmatprep.subr.mxu0 0.0
    %212 = vmatpush1.msra.mxu0 0.0
    %213 = vmatprep.subr.mxu0 0.0
    %214 = vmatpush1.msra.mxu0 0.0
    %215 = vmatprep.subr.mxu0 0.0
    %216 = vmatpush1.msra.mxu0 0.0
    %217 = vmatprep.subr.mxu0 0.0
    %218 = vmatpush1.msra.mxu0 0.0
    %219 = vmatprep.subr.mxu0 0.0
    %220 = vmatpush1.msra.mxu0 0.0
    %221 = vmatprep.subr.mxu0 0.0
    %222 = vmatpush1.msra.mxu0 0.0
    %223 = vmatprep.subr.mxu0 0.0
    %224 = vmatpush1.msra.mxu0 0.0
    %225 = vmatprep.subr.mxu0 0.0
    %226 = vmatpush1.msra.mxu0 0.0
    %227 = vmatprep.subr.mxu0 0.0
    %228 = vmatpush1.msra.mxu0 0.0
    %229 = vmatprep.subr.mxu0 0.0
    %230 = vmatpush1.msra.mxu0 0.0
    %231 = vmatprep.subr.mxu0 0.0
    %232 = vmatpush1.msra.mxu0 0.0
    %233 = vmatprep.subr.mxu0 0.0
    %234 = vmatpush1.msra.mxu0 0.0
    %235 = vmatprep.subr.mxu0 0.0
    %236 = vmatpush1.msra.mxu0 0.0
    %237 = vmatprep.subr.mxu0 0.0
    %238 = vmatpush1.msra.mxu0 0.0
    %239 = vmatprep.subr.mxu0 0.0
    %240 = vmatpush1.msra.mxu0 0.0
    %241 = vmatprep.subr.mxu0 0.0
    %242 = vmatpush1.msra.mxu0 0.0
    %243 = vmatprep.subr.mxu0 0.0
    %244 = vmatpush1.msra.mxu0 0.0
    %245 = vmatprep.subr.mxu0 0.0
    %246 = vmatpush1.msra.mxu0 0.0
    %247 = vmatprep.mubr.f32.mxu0 0.0
    %248 = vmatmul.mubr.f32.gmra.mrb[0].mxu0 %v181
    %v249 = vpop.f32.mrb[0].mxu0
    %v250 = vadd.f32 0.0, %v249
    %v251 = vpop.f32.mrb[0].mxu0
    %252 = vdwg.mxu0
    %v253 = vld [vmem:[%s7] sm:$0xff]
    %v254 = vmul.f32 %v162, %v253
    %v255 = vld [vmem:[%s8] sm:$0xff]
    %v256 = vmul.f32 %v250, %v255
    %v257 = vadd.f32 %v254, %v256
    %259 = vrot.lane.b32.xlu0 %v257, 64
    %v260 = vpop.permute.xlu0 %259
    %vm262 = vcmask 261120
    %263 = vst.msk [vmem:[#allocation2] sm:$0xff] %vm262, %v260
    %264 = vrot.lane.b32.xlu0 %v162, 32
    %v265 = vpop.permute.xlu0 %264
    %267 = vst.msk [vmem:[#allocation3] sm:$0xff] %vm262, %v265
    %s268 = sld [smem:[#allocation5]]
    %s269 = smul.addr %s268, 16
    %s270 = scalar_lea.hbm %s15, %s269
    // Predicated region
    $region50: #{flash_cohere_layer.1} parent=1 // pred_check
      _
    $region51: #{flash_cohere_layer.1} parent=1 // pred_check_branch
      %272 = sbr.rel target = $region53
    $region52: #{flash_cohere_layer.1} parent=1 // pred_region
      %273 = sst [smem:[#allocation13]] [#allocation12]
      %274 = sst [smem:[#allocation14]] [#allocation11]
    $region53: #{flash_cohere_layer.1} parent=1 // pred_fallthru
      _
    %276 = shalt.err (0)
    %s278 = sshll.u32 [#allocation2], 4
    %s279 = int_to_ptr.vmem [resolvable:$true] %s278
    %281 = dma.vmem_to_hbm [thread:$0]  %s279, 16, %s270, [#allocation4]
    %s282 = smul.addr %s268, 16
    %s283 = scalar_lea.hbm %s16, %s282
    %s284 = scalar_lea.sflag [#allocation4], 8
    // Predicated region
    $region54: #{flash_cohere_layer.1} parent=1 // pred_check
      _
    $region55: #{flash_cohere_layer.1} parent=1 // pred_check_branch
      %286 = sbr.rel target = $region57
    $region56: #{flash_cohere_layer.1} parent=1 // pred_region
      %287 = sst [smem:[#allocation13]] [#allocation16]
      %288 = sst [smem:[#allocation14]] [#allocation15]
    $region57: #{flash_cohere_layer.1} parent=1 // pred_fallthru
      _
    %290 = shalt.err (0)
    %s292 = sshll.u32 [#allocation3], 4
    %s293 = int_to_ptr.vmem [resolvable:$true] %s292
    %295 = dma.vmem_to_hbm [thread:$0]  %s293, 16, %s283, %s284
    %s296 = sld [smem:[#allocation5 + $0x1]]
    %s297 = scalar_lea.vmem [#allocation2], 1
    %s298 = smul.addr %s296, 16
    %s299 = scalar_lea.hbm %s15, %s298
    %s300 = scalar_lea.sflag [#allocation4], 1
    // Predicated region
    $region58: #{flash_cohere_layer.1} parent=1 // pred_check
      _
    $region59: #{flash_cohere_layer.1} parent=1 // pred_check_branch
      %302 = sbr.rel target = $region61
    $region60: #{flash_cohere_layer.1} parent=1 // pred_region
      %303 = sst [smem:[#allocation13]] [#allocation18]
      %304 = sst [smem:[#allocation14]] [#allocation17]
    $region61: #{flash_cohere_layer.1} parent=1 // pred_fallthru
      _
    %306 = shalt.err (0)
    %s308 = sshll.u32 %s297, 4
    %s309 = int_to_ptr.vmem [resolvable:$true] %s308
    %311 = dma.vmem_to_hbm [thread:$0]  %s309, 16, %s299, %s300
    %s312 = scalar_lea.vmem [#allocation3], 1
    %s313 = smul.addr %s296, 16
    %s314 = scalar_lea.hbm %s16, %s313
    %s315 = scalar_lea.sflag [#allocation4], 9
    // Predicated region
    $region62: #{flash_cohere_layer.1} parent=1 // pred_check
      _
    $region63: #{flash_cohere_layer.1} parent=1 // pred_check_branch
      %317 = sbr.rel target = $region65
    $region64: #{flash_cohere_layer.1} parent=1 // pred_region
      %318 = sst [smem:[#allocation13]] [#allocation20]
      %319 = sst [smem:[#allocation14]] [#allocation19]
    $region65: #{flash_cohere_layer.1} parent=1 // pred_fallthru
      _
    %321 = shalt.err (0)
    %s323 = sshll.u32 %s312, 4
    %s324 = int_to_ptr.vmem [resolvable:$true] %s323
    %326 = dma.vmem_to_hbm [thread:$0]  %s324, 16, %s314, %s315
    %s327 = sld [smem:[#allocation5 + $0x2]]
    %s328 = scalar_lea.vmem [#allocation2], 2
    %s329 = smul.addr %s327, 16
    %s330 = scalar_lea.hbm %s15, %s329
    %s331 = scalar_lea.sflag [#allocation4], 2
    // Predicated region
    $region66: #{flash_cohere_layer.1} parent=1 // pred_check
      _
    $region67: #{flash_cohere_layer.1} parent=1 // pred_check_branch
      %333 = sbr.rel target = $region69
    $region68: #{flash_cohere_layer.1} parent=1 // pred_region
      %334 = sst [smem:[#allocation13]] [#allocation22]
      %335 = sst [smem:[#allocation14]] [#allocation21]
    $region69: #{flash_cohere_layer.1} parent=1 // pred_fallthru
      _
    %337 = shalt.err (0)
    %s339 = sshll.u32 %s328, 4
    %s340 = int_to_ptr.vmem [resolvable:$true] %s339
    %342 = dma.vmem_to_hbm [thread:$0]  %s340, 16, %s330, %s331
    %s343 = scalar_lea.vmem [#allocation3], 2
    %s344 = smul.addr %s327, 16
    %s345 = scalar_lea.hbm %s16, %s344
    %s346 = scalar_lea.sflag [#allocation4], 10
    // Predicated region
    $region70: #{flash_cohere_layer.1} parent=1 // pred_check
      _
    $region71: #{flash_cohere_layer.1} parent=1 // pred_check_branch
      %348 = sbr.rel target = $region73
    $region72: #{flash_cohere_layer.1} parent=1 // pred_region
      %349 = sst [smem:[#allocation13]] [#allocation24]
      %350 = sst [smem:[#allocation14]] [#allocation23]
    $region73: #{flash_cohere_layer.1} parent=1 // pred_fallthru
      _
    %352 = shalt.err (0)
    %s354 = sshll.u32 %s343, 4
    %s355 = int_to_ptr.vmem [resolvable:$true] %s354
    %357 = dma.vmem_to_hbm [thread:$0]  %s355, 16, %s345, %s346
    %s358 = sld [smem:[#allocation5 + $0x3]]
    %s359 = scalar_lea.vmem [#allocation2], 3
    %s360 = smul.addr %s358, 16
    %s361 = scalar_lea.hbm %s15, %s360
    %s362 = scalar_lea.sflag [#allocation4], 3
    // Predicated region
    $region74: #{flash_cohere_layer.1} parent=1 // pred_check
      _
    $region75: #{flash_cohere_layer.1} parent=1 // pred_check_branch
      %364 = sbr.rel target = $region77
    $region76: #{flash_cohere_layer.1} parent=1 // pred_region
      %365 = sst [smem:[#allocation13]] [#allocation26]
      %366 = sst [smem:[#allocation14]] [#allocation25]
    $region77: #{flash_cohere_layer.1} parent=1 // pred_fallthru
      _
    %368 = shalt.err (0)
    %s370 = sshll.u32 %s359, 4
    %s371 = int_to_ptr.vmem [resolvable:$true] %s370
    %373 = dma.vmem_to_hbm [thread:$0]  %s371, 16, %s361, %s362
    %s374 = scalar_lea.vmem [#allocation3], 3
    %s375 = smul.addr %s358, 16
    %s376 = scalar_lea.hbm %s16, %s375
    %s377 = scalar_lea.sflag [#allocation4], 11
    // Predicated region
    $region78: #{flash_cohere_layer.1} parent=1 // pred_check
      _
    $region79: #{flash_cohere_layer.1} parent=1 // pred_check_branch
      %379 = sbr.rel target = $region81
    $region80: #{flash_cohere_layer.1} parent=1 // pred_region
      %380 = sst [smem:[#allocation13]] [#allocation28]
      %381 = sst [smem:[#allocation14]] [#allocation27]
    $region81: #{flash_cohere_layer.1} parent=1 // pred_fallthru
      _
    %383 = shalt.err (0)
    %s385 = sshll.u32 %s374, 4
    %s386 = int_to_ptr.vmem [resolvable:$true] %s385
    %388 = dma.vmem_to_hbm [thread:$0]  %s386, 16, %s376, %s377
    %s389 = sld [smem:[#allocation5 + $0x4]]
    %s390 = scalar_lea.vmem [#allocation2], 4
    %s391 = smul.addr %s389, 16
    %s392 = scalar_lea.hbm %s15, %s391
    %s393 = scalar_lea.sflag [#allocation4], 4
    // Predicated region
    $region82: #{flash_cohere_layer.1} parent=1 // pred_check
      _
    $region83: #{flash_cohere_layer.1} parent=1 // pred_check_branch
      %395 = sbr.rel target = $region85
    $region84: #{flash_cohere_layer.1} parent=1 // pred_region
      %396 = sst [smem:[#allocation13]] [#allocation30]
      %397 = sst [smem:[#allocation14]] [#allocation29]
    $region85: #{flash_cohere_layer.1} parent=1 // pred_fallthru
      _
    %399 = shalt.err (0)
    %s401 = sshll.u32 %s390, 4
    %s402 = int_to_ptr.vmem [resolvable:$true] %s401
    %404 = dma.vmem_to_hbm [thread:$0]  %s402, 16, %s392, %s393
    %s405 = scalar_lea.vmem [#allocation3], 4
    %s406 = smul.addr %s389, 16
    %s407 = scalar_lea.hbm %s16, %s406
    %s408 = scalar_lea.sflag [#allocation4], 12
    // Predicated region
    $region86: #{flash_cohere_layer.1} parent=1 // pred_check
      _
    $region87: #{flash_cohere_layer.1} parent=1 // pred_check_branch
      %410 = sbr.rel target = $region89
    $region88: #{flash_cohere_layer.1} parent=1 // pred_region
      %411 = sst [smem:[#allocation13]] [#allocation32]
      %412 = sst [smem:[#allocation14]] [#allocation31]
    $region89: #{flash_cohere_layer.1} parent=1 // pred_fallthru
      _
    %414 = shalt.err (0)
    %s416 = sshll.u32 %s405, 4
    %s417 = int_to_ptr.vmem [resolvable:$true] %s416
    %419 = dma.vmem_to_hbm [thread:$0]  %s417, 16, %s407, %s408
    %s420 = sld [smem:[#allocation5 + $0x5]]
    %s421 = scalar_lea.vmem [#allocation2], 5
    %s422 = smul.addr %s420, 16
    %s423 = scalar_lea.hbm %s15, %s422
    %s424 = scalar_lea.sflag [#allocation4], 5
    // Predicated region
    $region90: #{flash_cohere_layer.1} parent=1 // pred_check
      _
    $region91: #{flash_cohere_layer.1} parent=1 // pred_check_branch
      %426 = sbr.rel target = $region93
    $region92: #{flash_cohere_layer.1} parent=1 // pred_region
      %427 = sst [smem:[#allocation13]] [#allocation34]
      %428 = sst [smem:[#allocation14]] [#allocation33]
    $region93: #{flash_cohere_layer.1} parent=1 // pred_fallthru
      _
    %430 = shalt.err (0)
    %s432 = sshll.u32 %s421, 4
    %s433 = int_to_ptr.vmem [resolvable:$true] %s432
    %435 = dma.vmem_to_hbm [thread:$0]  %s433, 16, %s423, %s424
    %s436 = scalar_lea.vmem [#allocation3], 5
    %s437 = smul.addr %s420, 16
    %s438 = scalar_lea.hbm %s16, %s437
    %s439 = scalar_lea.sflag [#allocation4], 13
    // Predicated region
    $region94: #{flash_cohere_layer.1} parent=1 // pred_check
      _
    $region95: #{flash_cohere_layer.1} parent=1 // pred_check_branch
      %441 = sbr.rel target = $region97
    $region96: #{flash_cohere_layer.1} parent=1 // pred_region
      %442 = sst [smem:[#allocation13]] [#allocation36]
      %443 = sst [smem:[#allocation14]] [#allocation35]
    $region97: #{flash_cohere_layer.1} parent=1 // pred_fallthru
      _
    %445 = shalt.err (0)
    %s447 = sshll.u32 %s436, 4
    %s448 = int_to_ptr.vmem [resolvable:$true] %s447
    %450 = dma.vmem_to_hbm [thread:$0]  %s448, 16, %s438, %s439
    %s451 = sld [smem:[#allocation5 + $0x6]]
    %s452 = scalar_lea.vmem [#allocation2], 6
    %s453 = smul.addr %s451, 16
    %s454 = scalar_lea.hbm %s15, %s453
    %s455 = scalar_lea.sflag [#allocation4], 6
    // Predicated region
    $region98: #{flash_cohere_layer.1} parent=1 // pred_check
      _
    $region99: #{flash_cohere_layer.1} parent=1 // pred_check_branch
      %457 = sbr.rel target = $region101
    $region100: #{flash_cohere_layer.1} parent=1 // pred_region
      %458 = sst [smem:[#allocation13]] [#allocation38]
      %459 = sst [smem:[#allocation14]] [#allocation37]
    $region101: #{flash_cohere_layer.1} parent=1 // pred_fallthru
      _
    %461 = shalt.err (0)
    %s463 = sshll.u32 %s452, 4
    %s464 = int_to_ptr.vmem [resolvable:$true] %s463
    %466 = dma.vmem_to_hbm [thread:$0]  %s464, 16, %s454, %s455
    %s467 = scalar_lea.vmem [#allocation3], 6
    %s468 = smul.addr %s451, 16
    %s469 = scalar_lea.hbm %s16, %s468
    %s470 = scalar_lea.sflag [#allocation4], 14
    // Predicated region
    $region102: #{flash_cohere_layer.1} parent=1 // pred_check
      _
    $region103: #{flash_cohere_layer.1} parent=1 // pred_check_branch
      %472 = sbr.rel target = $region105
    $region104: #{flash_cohere_layer.1} parent=1 // pred_region
      %473 = sst [smem:[#allocation13]] [#allocation40]
      %474 = sst [smem:[#allocation14]] [#allocation39]
    $region105: #{flash_cohere_layer.1} parent=1 // pred_fallthru
      _
    %476 = shalt.err (0)
    %s478 = sshll.u32 %s467, 4
    %s479 = int_to_ptr.vmem [resolvable:$true] %s478
    %481 = dma.vmem_to_hbm [thread:$0]  %s479, 16, %s469, %s470
    %s482 = sld [smem:[#allocation5 + $0x7]]
    %s483 = scalar_lea.vmem [#allocation2], 7
    %s484 = smul.addr %s482, 16
    %s485 = scalar_lea.hbm %s15, %s484
    %s486 = scalar_lea.sflag [#allocation4], 7
    // Predicated region
    $region106: #{flash_cohere_layer.1} parent=1 // pred_check
      _
    $region107: #{flash_cohere_layer.1} parent=1 // pred_check_branch
      %488 = sbr.rel target = $region109
    $region108: #{flash_cohere_layer.1} parent=1 // pred_region
      %489 = sst [smem:[#allocation13]] [#allocation42]
      %490 = sst [smem:[#allocation14]] [#allocation41]
    $region109: #{flash_cohere_layer.1} parent=1 // pred_fallthru
      _
    %492 = shalt.err (0)
    %s494 = sshll.u32 %s483, 4
    %s495 = int_to_ptr.vmem [resolvable:$true] %s494
    %497 = dma.vmem_to_hbm [thread:$0]  %s495, 16, %s485, %s486
    %s498 = scalar_lea.vmem [#allocation3], 7
    %s499 = smul.addr %s482, 16
    %s500 = scalar_lea.hbm %s16, %s499
    %s501 = scalar_lea.sflag [#allocation4], 15
    // Predicated region
    $region110: #{flash_cohere_layer.1} parent=1 // pred_check
      _
    $region111: #{flash_cohere_layer.1} parent=1 // pred_check_branch
      %503 = sbr.rel target = $region113
    $region112: #{flash_cohere_layer.1} parent=1 // pred_region
      %504 = sst [smem:[#allocation13]] [#allocation44]
      %505 = sst [smem:[#allocation14]] [#allocation43]
    $region113: #{flash_cohere_layer.1} parent=1 // pred_fallthru
      _
    %507 = shalt.err (0)
    %s509 = sshll.u32 %s498, 4
    %s510 = int_to_ptr.vmem [resolvable:$true] %s509
    %512 = dma.vmem_to_hbm [thread:$0]  %s510, 16, %s500, %s501
    %v513 = vlaneseq
    %v514 = vshrl.u32 %v513, 7
    %v515 = vlaneseq
    %v516 = vand.u32 %v515, 127
    %vm517 = vcmp.le.s32.totalorder %v516, %v514
    %v518 = vld [vmem:[%s4] sm:$0xf]
    %v519 = vld [vmem:[%s4 + $0x4] sm:$0xf]
    %v520 = vld [vmem:[%s4 + $0x8] sm:$0xf]
    %v521 = vld [vmem:[%s4 + $0xc] sm:$0xf]
    %v522 = vld [vmem:[%s4 + $0x10] sm:$0xf]
    %v523 = vld [vmem:[%s4 + $0x14] sm:$0xf]
    %v524 = vld [vmem:[%s4 + $0x18] sm:$0xf]
    %v525 = vld [vmem:[%s4 + $0x1c] sm:$0xf]
    %vm526 = vcmask 130048
    %v527 = vsel %vm526, %v257, 0
    %v529 = vsel %vm526, %v260, 0
    %531 = vmatprep.subr.mxu0 0.0
    %532 = vmatpush1.xpose.msra.mxu0 %v529
    %533 = vmatprep.subr.mxu0 0.0
    %534 = vmatpush1.xpose.msra.mxu0 0.0
    %535 = vmatprep.subr.mxu0 0.0
    %536 = vmatpush1.xpose.msra.mxu0 0.0
    %537 = vmatprep.subr.mxu0 0.0
    %538 = vmatpush1.xpose.msra.mxu0 0.0
    %539 = vmatprep.subr.mxu0 0.0
    %540 = vmatpush1.xpose.msra.mxu0 0.0
    %541 = vmatprep.subr.mxu0 0.0
    %542 = vmatpush1.xpose.msra.mxu0 0.0
    %543 = vmatprep.subr.mxu0 0.0
    %544 = vmatpush1.xpose.msra.mxu0 0.0
    %545 = vmatprep.subr.mxu0 0.0
    %546 = vmatpush1.xpose.msra.mxu0 0.0
    %547 = vmatprep.subr.mxu0 0.0
    %548 = vmatpush1.xpose.msra.mxu0 0.0
    %549 = vmatprep.subr.mxu0 0.0
    %550 = vmatpush1.xpose.msra.mxu0 0.0
    %551 = vmatprep.subr.mxu0 0.0
    %552 = vmatpush1.xpose.msra.mxu0 0.0
    %553 = vmatprep.subr.mxu0 0.0
    %554 = vmatpush1.xpose.msra.mxu0 0.0
    %555 = vmatprep.subr.mxu0 0.0
    %556 = vmatpush1.xpose.msra.mxu0 0.0
    %557 = vmatprep.subr.mxu0 0.0
    %558 = vmatpush1.xpose.msra.mxu0 0.0
    %559 = vmatprep.subr.mxu0 0.0
    %560 = vmatpush1.xpose.msra.mxu0 0.0
    %561 = vmatprep.subr.mxu0 0.0
    %562 = vmatpush1.xpose.msra.mxu0 0.0
    %563 = vmatprep.subr.mxu0 0.0
    %564 = vmatpush1.xpose.msra.mxu0 0.0
    %565 = vmatprep.subr.mxu0 0.0
    %566 = vmatpush1.xpose.msra.mxu0 0.0
    %567 = vmatprep.subr.mxu0 0.0
    %568 = vmatpush1.xpose.msra.mxu0 0.0
    %569 = vmatprep.subr.mxu0 0.0
    %570 = vmatpush1.xpose.msra.mxu0 0.0
    %571 = vmatprep.subr.mxu0 0.0
    %572 = vmatpush1.xpose.msra.mxu0 0.0
    %573 = vmatprep.subr.mxu0 0.0
    %574 = vmatpush1.xpose.msra.mxu0 0.0
    %575 = vmatprep.subr.mxu0 0.0
    %576 = vmatpush1.xpose.msra.mxu0 0.0
    %577 = vmatprep.subr.mxu0 0.0
    %578 = vmatpush1.xpose.msra.mxu0 0.0
    %579 = vmatprep.subr.mxu0 0.0
    %580 = vmatpush1.xpose.msra.mxu0 0.0
    %581 = vmatprep.subr.mxu0 0.0
    %582 = vmatpush1.xpose.msra.mxu0 0.0
    %583 = vmatprep.subr.mxu0 0.0
    %584 = vmatpush1.xpose.msra.mxu0 0.0
    %585 = vmatprep.subr.mxu0 0.0
    %586 = vmatpush1.xpose.msra.mxu0 0.0
    %587 = vmatprep.subr.mxu0 0.0
    %588 = vmatpush1.xpose.msra.mxu0 0.0
    %589 = vmatprep.subr.mxu0 0.0
    %590 = vmatpush1.xpose.msra.mxu0 0.0
    %591 = vmatprep.subr.mxu0 0.0
    %592 = vmatpush1.xpose.msra.mxu0 0.0
    %593 = vmatprep.subr.mxu0 0.0
    %594 = vmatpush1.xpose.msra.mxu0 0.0
    %595 = vmatprep.mubr.f32.mxu0 0.0
    %596 = vmatmul.mubr.f32.gmra.mrb[0].mxu0 %v527
    %v597 = vpop.f32.mrb[0].mxu0
    %v598 = vadd.f32 0.0, %v597
    %v599 = vpop.f32.mrb[0].mxu0
    %600 = vdwg.mxu0
    %v601 = vmul.f32 %v598, 0.25
    %v602 = vsel %vm517, %v601, -1e+30
    %vm603 = vcmask 64512
    %v604 = vsel %vm603, %v602, -inf
    %605 = vmax.xlane.f32.xlu0 %v604
    %v606 = vpop.xlane.xlu0 %605
    %v607 = vsub.f32 %v602, %v606
    %v608 = vmul.f32 %v607, 1.442695
    %v609 = vpow.pop %v608
    %v610 = vsel %vm603, %v609, 0.0
    %611 = vadd.xlane.f32.xlu0 %v610
    %v612 = vpop.xlane.xlu0 %611
    %v613 = vrcp.pop %v612
    %v614 = vmul.f32 %v609, %v613
    %v615 = vpack.c.bf16 %v614, %v614
    %v616 = vpack.c.bf16 %v162, %v162
    %618 = vrot.lane.b32.xlu0 %v616, 32
    %v619 = vpop.permute.xlu0 %618
    %v621 = vsel %vm603, %v615, 0
    %vm623 = vcmask 1043456
    %v625 = vsel %vm623, %v619, 0
    %627 = vmatprep.subr.bf16.mxu0 0
    %628 = vmatpush1.bf16.msra.mxu0 %v625
    %629 = vmatprep.subr.bf16.mxu0 0
    %630 = vmatpush1.bf16.msra.mxu0 0
    %631 = vmatprep.subr.bf16.mxu0 0
    %632 = vmatpush1.bf16.msra.mxu0 0
    %633 = vmatprep.subr.bf16.mxu0 0
    %634 = vmatpush1.bf16.msra.mxu0 0
    %635 = vmatprep.subr.bf16.mxu0 0
    %636 = vmatpush1.bf16.msra.mxu0 0
    %637 = vmatprep.subr.bf16.mxu0 0
    %638 = vmatpush1.bf16.msra.mxu0 0
    %639 = vmatprep.subr.bf16.mxu0 0
    %640 = vmatpush1.bf16.msra.mxu0 0
    %641 = vmatprep.subr.bf16.mxu0 0
    %642 = vmatpush1.bf16.msra.mxu0 0
    %643 = vmatprep.subr.bf16.mxu0 0
    %644 = vmatpush1.bf16.msra.mxu0 0
    %645 = vmatprep.subr.bf16.mxu0 0
    %646 = vmatpush1.bf16.msra.mxu0 0
    %647 = vmatprep.subr.bf16.mxu0 0
    %648 = vmatpush1.bf16.msra.mxu0 0
    %649 = vmatprep.subr.bf16.mxu0 0
    %650 = vmatpush1.bf16.msra.mxu0 0
    %651 = vmatprep.subr.bf16.mxu0 0
    %652 = vmatpush1.bf16.msra.mxu0 0
    %653 = vmatprep.subr.bf16.mxu0 0
    %654 = vmatpush1.bf16.msra.mxu0 0
    %655 = vmatprep.subr.bf16.mxu0 0
    %656 = vmatpush1.bf16.msra.mxu0 0
    %657 = vmatprep.subr.bf16.mxu0 0
    %658 = vmatpush1.bf16.msra.mxu0 0
    %659 = vmatprep.mubr.bf16.mxu0 0
    %660 = vmatmul.mubr.bf16.gmra.mrb[0].mxu0 %v621
    %v661 = vpop.f32.mrb[0].mxu0
    %v662 = vadd.f32 0.0, %v661
    %v663 = vpop.f32.mrb[0].mxu0
    %v664 = vpop.f32.mrb[0].mxu0
    %v665 = vpop.f32.mrb[0].mxu0
    %666 = vdwg.mxu0
    %v667 = vpack.c.bf16 %v662, %v662
    %668 = vrot.lane.b32.xlu0 %v257, 112
    %v669 = vpop.permute.xlu0 %668
    %v670 = vsel %vm526, %v669, 0
    %672 = vmatprep.subr.mxu0 0.0
    %673 = vmatpush1.xpose.msra.mxu0 %v529
    %674 = vmatprep.subr.mxu0 0.0
    %675 = vmatpush1.xpose.msra.mxu0 0.0
    %676 = vmatprep.subr.mxu0 0.0
    %677 = vmatpush1.xpose.msra.mxu0 0.0
    %678 = vmatprep.subr.mxu0 0.0
    %679 = vmatpush1.xpose.msra.mxu0 0.0
    %680 = vmatprep.subr.mxu0 0.0
    %681 = vmatpush1.xpose.msra.mxu0 0.0
    %682 = vmatprep.subr.mxu0 0.0
    %683 = vmatpush1.xpose.msra.mxu0 0.0
    %684 = vmatprep.subr.mxu0 0.0
    %685 = vmatpush1.xpose.msra.mxu0 0.0
    %686 = vmatprep.subr.mxu0 0.0
    %687 = vmatpush1.xpose.msra.mxu0 0.0
    %688 = vmatprep.subr.mxu0 0.0
    %689 = vmatpush1.xpose.msra.mxu0 0.0
    %690 = vmatprep.subr.mxu0 0.0
    %691 = vmatpush1.xpose.msra.mxu0 0.0
    %692 = vmatprep.subr.mxu0 0.0
    %693 = vmatpush1.xpose.msra.mxu0 0.0
    %694 = vmatprep.subr.mxu0 0.0
    %695 = vmatpush1.xpose.msra.mxu0 0.0
    %696 = vmatprep.subr.mxu0 0.0
    %697 = vmatpush1.xpose.msra.mxu0 0.0
    %698 = vmatprep.subr.mxu0 0.0
    %699 = vmatpush1.xpose.msra.mxu0 0.0
    %700 = vmatprep.subr.mxu0 0.0
    %701 = vmatpush1.xpose.msra.mxu0 0.0
    %702 = vmatprep.subr.mxu0 0.0
    %703 = vmatpush1.xpose.msra.mxu0 0.0
    %704 = vmatprep.subr.mxu0 0.0
    %705 = vmatpush1.xpose.msra.mxu0 0.0
    %706 = vmatprep.subr.mxu0 0.0
    %707 = vmatpush1.xpose.msra.mxu0 0.0
    %708 = vmatprep.subr.mxu0 0.0
    %709 = vmatpush1.xpose.msra.mxu0 0.0
    %710 = vmatprep.subr.mxu0 0.0
    %711 = vmatpush1.xpose.msra.mxu0 0.0
    %712 = vmatprep.subr.mxu0 0.0
    %713 = vmatpush1.xpose.msra.mxu0 0.0
    %714 = vmatprep.subr.mxu0 0.0
    %715 = vmatpush1.xpose.msra.mxu0 0.0
    %716 = vmatprep.subr.mxu0 0.0
    %717 = vmatpush1.xpose.msra.mxu0 0.0
    %718 = vmatprep.subr.mxu0 0.0
    %719 = vmatpush1.xpose.msra.mxu0 0.0
    %720 = vmatprep.subr.mxu0 0.0
    %721 = vmatpush1.xpose.msra.mxu0 0.0
    %722 = vmatprep.subr.mxu0 0.0
    %723 = vmatpush1.xpose.msra.mxu0 0.0
    %724 = vmatprep.subr.mxu0 0.0
    %725 = vmatpush1.xpose.msra.mxu0 0.0
    %726 = vmatprep.subr.mxu0 0.0
    %727 = vmatpush1.xpose.msra.mxu0 0.0
    %728 = vmatprep.subr.mxu0 0.0
    %729 = vmatpush1.xpose.msra.mxu0 0.0
    %730 = vmatprep.subr.mxu0 0.0
    %731 = vmatpush1.xpose.msra.mxu0 0.0
    %732 = vmatprep.subr.mxu0 0.0
    %733 = vmatpush1.xpose.msra.mxu0 0.0
    %734 = vmatprep.subr.mxu0 0.0
    %735 = vmatpush1.xpose.msra.mxu0 0.0
    %736 = vmatprep.mubr.f32.mxu0 0.0
    %737 = vmatmul.mubr.f32.gmra.mrb[0].mxu0 %v670
    %v738 = vpop.f32.mrb[0].mxu0
    %v739 = vadd.f32 0.0, %v738
    %v740 = vpop.f32.mrb[0].mxu0
    %741 = vdwg.mxu0
    %v742 = vmul.f32 %v739, 0.25
    %v743 = vsel %vm517, %v742, -1e+30
    %v744 = vsel %vm603, %v743, -inf
    %745 = vmax.xlane.f32.xlu0 %v744
    %v746 = vpop.xlane.xlu0 %745
    %v747 = vsub.f32 %v743, %v746
    %v748 = vmul.f32 %v747, 1.442695
    %v749 = vpow.pop %v748
    %v750 = vsel %vm603, %v749, 0.0
    %751 = vadd.xlane.f32.xlu0 %v750
    %v752 = vpop.xlane.xlu0 %751
    %v753 = vrcp.pop %v752
    %v754 = vmul.f32 %v749, %v753
    %v755 = vpack.c.bf16 %v754, %v754
    %v757 = vsel %vm603, %v755, 0
    %759 = vmatprep.subr.bf16.mxu0 0
    %760 = vmatpush1.bf16.msra.mxu0 %v625
    %761 = vmatprep.subr.bf16.mxu0 0
    %762 = vmatpush1.bf16.msra.mxu0 0
    %763 = vmatprep.subr.bf16.mxu0 0
    %764 = vmatpush1.bf16.msra.mxu0 0
    %765 = vmatprep.subr.bf16.mxu0 0
    %766 = vmatpush1.bf16.msra.mxu0 0
    %767 = vmatprep.subr.bf16.mxu0 0
    %768 = vmatpush1.bf16.msra.mxu0 0
    %769 = vmatprep.subr.bf16.mxu0 0
    %770 = vmatpush1.bf16.msra.mxu0 0
    %771 = vmatprep.subr.bf16.mxu0 0
    %772 = vmatpush1.bf16.msra.mxu0 0
    %773 = vmatprep.subr.bf16.mxu0 0
    %774 = vmatpush1.bf16.msra.mxu0 0
    %775 = vmatprep.subr.bf16.mxu0 0
    %776 = vmatpush1.bf16.msra.mxu0 0
    %777 = vmatprep.subr.bf16.mxu0 0
    %778 = vmatpush1.bf16.msra.mxu0 0
    %779 = vmatprep.subr.bf16.mxu0 0
    %780 = vmatpush1.bf16.msra.mxu0 0
    %781 = vmatprep.subr.bf16.mxu0 0
    %782 = vmatpush1.bf16.msra.mxu0 0
    %783 = vmatprep.subr.bf16.mxu0 0
    %784 = vmatpush1.bf16.msra.mxu0 0
    %785 = vmatprep.subr.bf16.mxu0 0
    %786 = vmatpush1.bf16.msra.mxu0 0
    %787 = vmatprep.subr.bf16.mxu0 0
    %788 = vmatpush1.bf16.msra.mxu0 0
    %789 = vmatprep.subr.bf16.mxu0 0
    %790 = vmatpush1.bf16.msra.mxu0 0
    %791 = vmatprep.mubr.bf16.mxu0 0
    %792 = vmatmul.mubr.bf16.gmra.mrb[0].mxu0 %v757
    %v793 = vpop.f32.mrb[0].mxu0
    %v794 = vadd.f32 0.0, %v793
    %v795 = vpop.f32.mrb[0].mxu0
    %v796 = vpop.f32.mrb[0].mxu0
    %v797 = vpop.f32.mrb[0].mxu0
    %798 = vdwg.mxu0
    %v799 = vpack.c.bf16 %v794, %v794
    %v802 = vunpack.c.l.b16 %v520
    %v803 = vunpack.c.l.b16 %v521
    %v804 = vpack.c.b16 %v803, %v802
    %v807 = vsel %vm526, %v799, 0
    %809 = vmatprep.subr.bf16.mxu0 0
    %810 = vmatpush1.bf16.msra.mxu0 %v804
    %811 = vmatprep.subr.bf16.mxu0 0
    %812 = vmatpush1.bf16.msra.mxu0 0
    %813 = vmatprep.subr.bf16.mxu0 0
    %814 = vmatpush1.bf16.msra.mxu0 0
    %815 = vmatprep.subr.bf16.mxu0 0
    %816 = vmatpush1.bf16.msra.mxu0 0
    %817 = vmatprep.subr.bf16.mxu0 0
    %818 = vmatpush1.bf16.msra.mxu0 0
    %819 = vmatprep.subr.bf16.mxu0 0
    %820 = vmatpush1.bf16.msra.mxu0 0
    %821 = vmatprep.subr.bf16.mxu0 0
    %822 = vmatpush1.bf16.msra.mxu0 0
    %823 = vmatprep.subr.bf16.mxu0 0
    %824 = vmatpush1.bf16.msra.mxu0 0
    %825 = vmatprep.subr.bf16.mxu0 0
    %826 = vmatpush1.bf16.msra.mxu0 0
    %827 = vmatprep.subr.bf16.mxu0 0
    %828 = vmatpush1.bf16.msra.mxu0 0
    %829 = vmatprep.subr.bf16.mxu0 0
    %830 = vmatpush1.bf16.msra.mxu0 0
    %831 = vmatprep.subr.bf16.mxu0 0
    %832 = vmatpush1.bf16.msra.mxu0 0
    %833 = vmatprep.subr.bf16.mxu0 0
    %834 = vmatpush1.bf16.msra.mxu0 0
    %835 = vmatprep.subr.bf16.mxu0 0
    %836 = vmatpush1.bf16.msra.mxu0 0
    %837 = vmatprep.subr.bf16.mxu0 0
    %838 = vmatpush1.bf16.msra.mxu0 0
    %839 = vmatprep.subr.bf16.mxu0 0
    %840 = vmatpush1.bf16.msra.mxu0 0
    %841 = vmatprep.mubr.bf16.mxu0 0
    %842 = vmatmul.mubr.bf16.gmra.mrb[0].mxu0 %v807
    %v843 = vpop.f32.mrb[0].mxu0
    %v844 = vadd.f32 0.0, %v843
    %v845 = vpop.f32.mrb[0].mxu0
    %v846 = vpop.f32.mrb[0].mxu0
    %v847 = vpop.f32.mrb[0].mxu0
    %848 = vdwg.mxu0
    %v851 = vunpack.c.l.b16 %v518
    %v852 = vunpack.c.l.b16 %v519
    %v853 = vpack.c.b16 %v852, %v851
    %v856 = vsel %vm526, %v667, 0
    %858 = vmatprep.subr.bf16.mxu0 0
    %859 = vmatpush1.bf16.msra.mxu0 %v853
    %860 = vmatprep.subr.bf16.mxu0 0
    %861 = vmatpush1.bf16.msra.mxu0 0
    %862 = vmatprep.subr.bf16.mxu0 0
    %863 = vmatpush1.bf16.msra.mxu0 0
    %864 = vmatprep.subr.bf16.mxu0 0
    %865 = vmatpush1.bf16.msra.mxu0 0
    %866 = vmatprep.subr.bf16.mxu0 0
    %867 = vmatpush1.bf16.msra.mxu0 0
    %868 = vmatprep.subr.bf16.mxu0 0
    %869 = vmatpush1.bf16.msra.mxu0 0
    %870 = vmatprep.subr.bf16.mxu0 0
    %871 = vmatpush1.bf16.msra.mxu0 0
    %872 = vmatprep.subr.bf16.mxu0 0
    %873 = vmatpush1.bf16.msra.mxu0 0
    %874 = vmatprep.subr.bf16.mxu0 0
    %875 = vmatpush1.bf16.msra.mxu0 0
    %876 = vmatprep.subr.bf16.mxu0 0
    %877 = vmatpush1.bf16.msra.mxu0 0
    %878 = vmatprep.subr.bf16.mxu0 0
    %879 = vmatpush1.bf16.msra.mxu0 0
    %880 = vmatprep.subr.bf16.mxu0 0
    %881 = vmatpush1.bf16.msra.mxu0 0
    %882 = vmatprep.subr.bf16.mxu0 0
    %883 = vmatpush1.bf16.msra.mxu0 0
    %884 = vmatprep.subr.bf16.mxu0 0
    %885 = vmatpush1.bf16.msra.mxu0 0
    %886 = vmatprep.subr.bf16.mxu0 0
    %887 = vmatpush1.bf16.msra.mxu0 0
    %888 = vmatprep.subr.bf16.mxu0 0
    %889 = vmatpush1.bf16.msra.mxu0 0
    %890 = vmatprep.mubr.bf16.mxu0 0
    %891 = vmatmul.mubr.bf16.gmra.mrb[0].mxu0 %v856
    %v892 = vpop.f32.mrb[0].mxu0
    %v893 = vadd.f32 %v844, %v892
    %v894 = vpop.f32.mrb[0].mxu0
    %v895 = vpop.f32.mrb[0].mxu0
    %v896 = vpop.f32.mrb[0].mxu0
    %897 = vdwg.mxu0
    %898 = vrot.lane.b32.xlu0 %v257, 96
    %v899 = vpop.permute.xlu0 %898
    %900 = vrot.lane.b32.xlu0 %v257, 48
    %v901 = vpop.permute.xlu0 %900
    %v902 = vsel %vm526, %v899, 0
    %v904 = vsel %vm526, %v901, 0
    %906 = vmatprep.subr.mxu0 0.0
    %907 = vmatpush1.xpose.msra.mxu0 %v904
    %908 = vmatprep.subr.mxu0 0.0
    %909 = vmatpush1.xpose.msra.mxu0 0.0
    %910 = vmatprep.subr.mxu0 0.0
    %911 = vmatpush1.xpose.msra.mxu0 0.0
    %912 = vmatprep.subr.mxu0 0.0
    %913 = vmatpush1.xpose.msra.mxu0 0.0
    %914 = vmatprep.subr.mxu0 0.0
    %915 = vmatpush1.xpose.msra.mxu0 0.0
    %916 = vmatprep.subr.mxu0 0.0
    %917 = vmatpush1.xpose.msra.mxu0 0.0
    %918 = vmatprep.subr.mxu0 0.0
    %919 = vmatpush1.xpose.msra.mxu0 0.0
    %920 = vmatprep.subr.mxu0 0.0
    %921 = vmatpush1.xpose.msra.mxu0 0.0
    %922 = vmatprep.subr.mxu0 0.0
    %923 = vmatpush1.xpose.msra.mxu0 0.0
    %924 = vmatprep.subr.mxu0 0.0
    %925 = vmatpush1.xpose.msra.mxu0 0.0
    %926 = vmatprep.subr.mxu0 0.0
    %927 = vmatpush1.xpose.msra.mxu0 0.0
    %928 = vmatprep.subr.mxu0 0.0
    %929 = vmatpush1.xpose.msra.mxu0 0.0
    %930 = vmatprep.subr.mxu0 0.0
    %931 = vmatpush1.xpose.msra.mxu0 0.0
    %932 = vmatprep.subr.mxu0 0.0
    %933 = vmatpush1.xpose.msra.mxu0 0.0
    %934 = vmatprep.subr.mxu0 0.0
    %935 = vmatpush1.xpose.msra.mxu0 0.0
    %936 = vmatprep.subr.mxu0 0.0
    %937 = vmatpush1.xpose.msra.mxu0 0.0
    %938 = vmatprep.subr.mxu0 0.0
    %939 = vmatpush1.xpose.msra.mxu0 0.0
    %940 = vmatprep.subr.mxu0 0.0
    %941 = vmatpush1.xpose.msra.mxu0 0.0
    %942 = vmatprep.subr.mxu0 0.0
    %943 = vmatpush1.xpose.msra.mxu0 0.0
    %944 = vmatprep.subr.mxu0 0.0
    %945 = vmatpush1.xpose.msra.mxu0 0.0
    %946 = vmatprep.subr.mxu0 0.0
    %947 = vmatpush1.xpose.msra.mxu0 0.0
    %948 = vmatprep.subr.mxu0 0.0
    %949 = vmatpush1.xpose.msra.mxu0 0.0
    %950 = vmatprep.subr.mxu0 0.0
    %951 = vmatpush1.xpose.msra.mxu0 0.0
    %952 = vmatprep.subr.mxu0 0.0
    %953 = vmatpush1.xpose.msra.mxu0 0.0
    %954 = vmatprep.subr.mxu0 0.0
    %955 = vmatpush1.xpose.msra.mxu0 0.0
    %956 = vmatprep.subr.mxu0 0.0
    %957 = vmatpush1.xpose.msra.mxu0 0.0
    %958 = vmatprep.subr.mxu0 0.0
    %959 = vmatpush1.xpose.msra.mxu0 0.0
    %960 = vmatprep.subr.mxu0 0.0
    %961 = vmatpush1.xpose.msra.mxu0 0.0
    %962 = vmatprep.subr.mxu0 0.0
    %963 = vmatpush1.xpose.msra.mxu0 0.0
    %964 = vmatprep.subr.mxu0 0.0
    %965 = vmatpush1.xpose.msra.mxu0 0.0
    %966 = vmatprep.subr.mxu0 0.0
    %967 = vmatpush1.xpose.msra.mxu0 0.0
    %968 = vmatprep.subr.mxu0 0.0
    %969 = vmatpush1.xpose.msra.mxu0 0.0
    %970 = vmatprep.mubr.f32.mxu0 0.0
    %971 = vmatmul.mubr.f32.gmra.mrb[0].mxu0 %v902
    %v972 = vpop.f32.mrb[0].mxu0
    %v973 = vadd.f32 0.0, %v972
    %v974 = vpop.f32.mrb[0].mxu0
    %975 = vdwg.mxu0
    %v976 = vmul.f32 %v973, 0.25
    %v977 = vsel %vm517, %v976, -1e+30
    %v978 = vsel %vm603, %v977, -inf
    %979 = vmax.xlane.f32.xlu0 %v978
    %v980 = vpop.xlane.xlu0 %979
    %v981 = vsub.f32 %v977, %v980
    %v982 = vmul.f32 %v981, 1.442695
    %v983 = vpow.pop %v982
    %v984 = vsel %vm603, %v983, 0.0
    %985 = vadd.xlane.f32.xlu0 %v984
    %v986 = vpop.xlane.xlu0 %985
    %v987 = vrcp.pop %v986
    %v988 = vmul.f32 %v983, %v987
    %v989 = vpack.c.bf16 %v988, %v988
    %990 = vrot.lane.b32.xlu0 %v616, 16
    %v991 = vpop.permute.xlu0 %990
    %v993 = vsel %vm603, %v989, 0
    %v996 = vsel %vm623, %v991, 0
    %998 = vmatprep.subr.bf16.mxu0 0
    %999 = vmatpush1.bf16.msra.mxu0 %v996
    %1000 = vmatprep.subr.bf16.mxu0 0
    %1001 = vmatpush1.bf16.msra.mxu0 0
    %1002 = vmatprep.subr.bf16.mxu0 0
    %1003 = vmatpush1.bf16.msra.mxu0 0
    %1004 = vmatprep.subr.bf16.mxu0 0
    %1005 = vmatpush1.bf16.msra.mxu0 0
    %1006 = vmatprep.subr.bf16.mxu0 0
    %1007 = vmatpush1.bf16.msra.mxu0 0
    %1008 = vmatprep.subr.bf16.mxu0 0
    %1009 = vmatpush1.bf16.msra.mxu0 0
    %1010 = vmatprep.subr.bf16.mxu0 0
    %1011 = vmatpush1.bf16.msra.mxu0 0
    %1012 = vmatprep.subr.bf16.mxu0 0
    %1013 = vmatpush1.bf16.msra.mxu0 0
    %1014 = vmatprep.subr.bf16.mxu0 0
    %1015 = vmatpush1.bf16.msra.mxu0 0
    %1016 = vmatprep.subr.bf16.mxu0 0
    %1017 = vmatpush1.bf16.msra.mxu0 0
    %1018 = vmatprep.subr.bf16.mxu0 0
    %1019 = vmatpush1.bf16.msra.mxu0 0
    %1020 = vmatprep.subr.bf16.mxu0 0
    %1021 = vmatpush1.bf16.msra.mxu0 0
    %1022 = vmatprep.subr.bf16.mxu0 0
    %1023 = vmatpush1.bf16.msra.mxu0 0
    %1024 = vmatprep.subr.bf16.mxu0 0
    %1025 = vmatpush1.bf16.msra.mxu0 0
    %1026 = vmatprep.subr.bf16.mxu0 0
    %1027 = vmatpush1.bf16.msra.mxu0 0
    %1028 = vmatprep.subr.bf16.mxu0 0
    %1029 = vmatpush1.bf16.msra.mxu0 0
    %1030 = vmatprep.mubr.bf16.mxu0 0
    %1031 = vmatmul.mubr.bf16.gmra.mrb[0].mxu0 %v993
    %v1032 = vpop.f32.mrb[0].mxu0
    %v1033 = vadd.f32 0.0, %v1032
    %v1034 = vpop.f32.mrb[0].mxu0
    %v1035 = vpop.f32.mrb[0].mxu0
    %v1036 = vpop.f32.mrb[0].mxu0
    %1037 = vdwg.mxu0
    %v1038 = vpack.c.bf16 %v1033, %v1033
    %v1041 = vunpack.c.l.b16 %v522
    %v1042 = vunpack.c.l.b16 %v523
    %v1043 = vpack.c.b16 %v1042, %v1041
    %v1046 = vsel %vm526, %v1038, 0
    %1048 = vmatprep.subr.bf16.mxu0 0
    %1049 = vmatpush1.bf16.msra.mxu0 %v1043
    %1050 = vmatprep.subr.bf16.mxu0 0
    %1051 = vmatpush1.bf16.msra.mxu0 0
    %1052 = vmatprep.subr.bf16.mxu0 0
    %1053 = vmatpush1.bf16.msra.mxu0 0
    %1054 = vmatprep.subr.bf16.mxu0 0
    %1055 = vmatpush1.bf16.msra.mxu0 0
    %1056 = vmatprep.subr.bf16.mxu0 0
    %1057 = vmatpush1.bf16.msra.mxu0 0
    %1058 = vmatprep.subr.bf16.mxu0 0
    %1059 = vmatpush1.bf16.msra.mxu0 0
    %1060 = vmatprep.subr.bf16.mxu0 0
    %1061 = vmatpush1.bf16.msra.mxu0 0
    %1062 = vmatprep.subr.bf16.mxu0 0
    %1063 = vmatpush1.bf16.msra.mxu0 0
    %1064 = vmatprep.subr.bf16.mxu0 0
    %1065 = vmatpush1.bf16.msra.mxu0 0
    %1066 = vmatprep.subr.bf16.mxu0 0
    %1067 = vmatpush1.bf16.msra.mxu0 0
    %1068 = vmatprep.subr.bf16.mxu0 0
    %1069 = vmatpush1.bf16.msra.mxu0 0
    %1070 = vmatprep.subr.bf16.mxu0 0
    %1071 = vmatpush1.bf16.msra.mxu0 0
    %1072 = vmatprep.subr.bf16.mxu0 0
    %1073 = vmatpush1.bf16.msra.mxu0 0
    %1074 = vmatprep.subr.bf16.mxu0 0
    %1075 = vmatpush1.bf16.msra.mxu0 0
    %1076 = vmatprep.subr.bf16.mxu0 0
    %1077 = vmatpush1.bf16.msra.mxu0 0
    %1078 = vmatprep.subr.bf16.mxu0 0
    %1079 = vmatpush1.bf16.msra.mxu0 0
    %1080 = vmatprep.mubr.bf16.mxu0 0
    %1081 = vmatmul.mubr.bf16.gmra.mrb[0].mxu0 %v1046
    %v1082 = vpop.f32.mrb[0].mxu0
    %v1083 = vadd.f32 0.0, %v1082
    %v1084 = vpop.f32.mrb[0].mxu0
    %v1085 = vpop.f32.mrb[0].mxu0
    %v1086 = vpop.f32.mrb[0].mxu0
    %1087 = vdwg.mxu0
    %v1088 = vadd.f32 %v893, %v1083
    %1089 = vrot.lane.b32.xlu0 %v257, 80
    %v1090 = vpop.permute.xlu0 %1089
    %v1091 = vsel %vm526, %v1090, 0
    %1093 = vmatprep.subr.mxu0 0.0
    %1094 = vmatpush1.xpose.msra.mxu0 %v904
    %1095 = vmatprep.subr.mxu0 0.0
    %1096 = vmatpush1.xpose.msra.mxu0 0.0
    %1097 = vmatprep.subr.mxu0 0.0
    %1098 = vmatpush1.xpose.msra.mxu0 0.0
    %1099 = vmatprep.subr.mxu0 0.0
    %1100 = vmatpush1.xpose.msra.mxu0 0.0
    %1101 = vmatprep.subr.mxu0 0.0
    %1102 = vmatpush1.xpose.msra.mxu0 0.0
    %1103 = vmatprep.subr.mxu0 0.0
    %1104 = vmatpush1.xpose.msra.mxu0 0.0
    %1105 = vmatprep.subr.mxu0 0.0
    %1106 = vmatpush1.xpose.msra.mxu0 0.0
    %1107 = vmatprep.subr.mxu0 0.0
    %1108 = vmatpush1.xpose.msra.mxu0 0.0
    %1109 = vmatprep.subr.mxu0 0.0
    %1110 = vmatpush1.xpose.msra.mxu0 0.0
    %1111 = vmatprep.subr.mxu0 0.0
    %1112 = vmatpush1.xpose.msra.mxu0 0.0
    %1113 = vmatprep.subr.mxu0 0.0
    %1114 = vmatpush1.xpose.msra.mxu0 0.0
    %1115 = vmatprep.subr.mxu0 0.0
    %1116 = vmatpush1.xpose.msra.mxu0 0.0
    %1117 = vmatprep.subr.mxu0 0.0
    %1118 = vmatpush1.xpose.msra.mxu0 0.0
    %1119 = vmatprep.subr.mxu0 0.0
    %1120 = vmatpush1.xpose.msra.mxu0 0.0
    %1121 = vmatprep.subr.mxu0 0.0
    %1122 = vmatpush1.xpose.msra.mxu0 0.0
    %1123 = vmatprep.subr.mxu0 0.0
    %1124 = vmatpush1.xpose.msra.mxu0 0.0
    %1125 = vmatprep.subr.mxu0 0.0
    %1126 = vmatpush1.xpose.msra.mxu0 0.0
    %1127 = vmatprep.subr.mxu0 0.0
    %1128 = vmatpush1.xpose.msra.mxu0 0.0
    %1129 = vmatprep.subr.mxu0 0.0
    %1130 = vmatpush1.xpose.msra.mxu0 0.0
    %1131 = vmatprep.subr.mxu0 0.0
    %1132 = vmatpush1.xpose.msra.mxu0 0.0
    %1133 = vmatprep.subr.mxu0 0.0
    %1134 = vmatpush1.xpose.msra.mxu0 0.0
    %1135 = vmatprep.subr.mxu0 0.0
    %1136 = vmatpush1.xpose.msra.mxu0 0.0
    %1137 = vmatprep.subr.mxu0 0.0
    %1138 = vmatpush1.xpose.msra.mxu0 0.0
    %1139 = vmatprep.subr.mxu0 0.0
    %1140 = vmatpush1.xpose.msra.mxu0 0.0
    %1141 = vmatprep.subr.mxu0 0.0
    %1142 = vmatpush1.xpose.msra.mxu0 0.0
    %1143 = vmatprep.subr.mxu0 0.0
    %1144 = vmatpush1.xpose.msra.mxu0 0.0
    %1145 = vmatprep.subr.mxu0 0.0
    %1146 = vmatpush1.xpose.msra.mxu0 0.0
    %1147 = vmatprep.subr.mxu0 0.0
    %1148 = vmatpush1.xpose.msra.mxu0 0.0
    %1149 = vmatprep.subr.mxu0 0.0
    %1150 = vmatpush1.xpose.msra.mxu0 0.0
    %1151 = vmatprep.subr.mxu0 0.0
    %1152 = vmatpush1.xpose.msra.mxu0 0.0
    %1153 = vmatprep.subr.mxu0 0.0
    %1154 = vmatpush1.xpose.msra.mxu0 0.0
    %1155 = vmatprep.subr.mxu0 0.0
    %1156 = vmatpush1.xpose.msra.mxu0 0.0
    %1157 = vmatprep.mubr.f32.mxu0 0.0
    %1158 = vmatmul.mubr.f32.gmra.mrb[0].mxu0 %v1091
    %v1159 = vpop.f32.mrb[0].mxu0
    %v1160 = vadd.f32 0.0, %v1159
    %v1161 = vpop.f32.mrb[0].mxu0
    %1162 = vdwg.mxu0
    %v1163 = vmul.f32 %v1160, 0.25
    %v1164 = vsel %vm517, %v1163, -1e+30
    %v1165 = vsel %vm603, %v1164, -inf
    %1166 = vmax.xlane.f32.xlu0 %v1165
    %v1167 = vpop.xlane.xlu0 %1166
    %v1168 = vsub.f32 %v1164, %v1167
    %v1169 = vmul.f32 %v1168, 1.442695
    %v1170 = vpow.pop %v1169
    %v1171 = vsel %vm603, %v1170, 0.0
    %1172 = vadd.xlane.f32.xlu0 %v1171
    %v1173 = vpop.xlane.xlu0 %1172
    %v1174 = vrcp.pop %v1173
    %v1175 = vmul.f32 %v1170, %v1174
    %v1176 = vpack.c.bf16 %v1175, %v1175
    %v1178 = vsel %vm603, %v1176, 0
    %1180 = vmatprep.subr.bf16.mxu0 0
    %1181 = vmatpush1.bf16.msra.mxu0 %v996
    %1182 = vmatprep.subr.bf16.mxu0 0
    %1183 = vmatpush1.bf16.msra.mxu0 0
    %1184 = vmatprep.subr.bf16.mxu0 0
    %1185 = vmatpush1.bf16.msra.mxu0 0
    %1186 = vmatprep.subr.bf16.mxu0 0
    %1187 = vmatpush1.bf16.msra.mxu0 0
    %1188 = vmatprep.subr.bf16.mxu0 0
    %1189 = vmatpush1.bf16.msra.mxu0 0
    %1190 = vmatprep.subr.bf16.mxu0 0
    %1191 = vmatpush1.bf16.msra.mxu0 0
    %1192 = vmatprep.subr.bf16.mxu0 0
    %1193 = vmatpush1.bf16.msra.mxu0 0
    %1194 = vmatprep.subr.bf16.mxu0 0
    %1195 = vmatpush1.bf16.msra.mxu0 0
    %1196 = vmatprep.subr.bf16.mxu0 0
    %1197 = vmatpush1.bf16.msra.mxu0 0
    %1198 = vmatprep.subr.bf16.mxu0 0
    %1199 = vmatpush1.bf16.msra.mxu0 0
    %1200 = vmatprep.subr.bf16.mxu0 0
    %1201 = vmatpush1.bf16.msra.mxu0 0
    %1202 = vmatprep.subr.bf16.mxu0 0
    %1203 = vmatpush1.bf16.msra.mxu0 0
    %1204 = vmatprep.subr.bf16.mxu0 0
    %1205 = vmatpush1.bf16.msra.mxu0 0
    %1206 = vmatprep.subr.bf16.mxu0 0
    %1207 = vmatpush1.bf16.msra.mxu0 0
    %1208 = vmatprep.subr.bf16.mxu0 0
    %1209 = vmatpush1.bf16.msra.mxu0 0
    %1210 = vmatprep.subr.bf16.mxu0 0
    %1211 = vmatpush1.bf16.msra.mxu0 0
    %1212 = vmatprep.mubr.bf16.mxu0 0
    %1213 = vmatmul.mubr.bf16.gmra.mrb[0].mxu0 %v1178
    %v1214 = vpop.f32.mrb[0].mxu0
    %v1215 = vadd.f32 0.0, %v1214
    %v1216 = vpop.f32.mrb[0].mxu0
    %v1217 = vpop.f32.mrb[0].mxu0
    %v1218 = vpop.f32.mrb[0].mxu0
    %1219 = vdwg.mxu0
    %v1220 = vpack.c.bf16 %v1215, %v1215
    %v1223 = vunpack.c.l.b16 %v524
    %v1224 = vunpack.c.l.b16 %v525
    %v1225 = vpack.c.b16 %v1224, %v1223
    %v1228 = vsel %vm526, %v1220, 0
    %1230 = vmatprep.subr.bf16.mxu0 0
    %1231 = vmatpush1.bf16.msra.mxu0 %v1225
    %1232 = vmatprep.subr.bf16.mxu0 0
    %1233 = vmatpush1.bf16.msra.mxu0 0
    %1234 = vmatprep.subr.bf16.mxu0 0
    %1235 = vmatpush1.bf16.msra.mxu0 0
    %1236 = vmatprep.subr.bf16.mxu0 0
    %1237 = vmatpush1.bf16.msra.mxu0 0
    %1238 = vmatprep.subr.bf16.mxu0 0
    %1239 = vmatpush1.bf16.msra.mxu0 0
    %1240 = vmatprep.subr.bf16.mxu0 0
    %1241 = vmatpush1.bf16.msra.mxu0 0
    %1242 = vmatprep.subr.bf16.mxu0 0
    %1243 = vmatpush1.bf16.msra.mxu0 0
    %1244 = vmatprep.subr.bf16.mxu0 0
    %1245 = vmatpush1.bf16.msra.mxu0 0
    %1246 = vmatprep.subr.bf16.mxu0 0
    %1247 = vmatpush1.bf16.msra.mxu0 0
    %1248 = vmatprep.subr.bf16.mxu0 0
    %1249 = vmatpush1.bf16.msra.mxu0 0
    %1250 = vmatprep.subr.bf16.mxu0 0
    %1251 = vmatpush1.bf16.msra.mxu0 0
    %1252 = vmatprep.subr.bf16.mxu0 0
    %1253 = vmatpush1.bf16.msra.mxu0 0
    %1254 = vmatprep.subr.bf16.mxu0 0
    %1255 = vmatpush1.bf16.msra.mxu0 0
    %1256 = vmatprep.subr.bf16.mxu0 0
    %1257 = vmatpush1.bf16.msra.mxu0 0
    %1258 = vmatprep.subr.bf16.mxu0 0
    %1259 = vmatpush1.bf16.msra.mxu0 0
    %1260 = vmatprep.subr.bf16.mxu0 0
    %1261 = vmatpush1.bf16.msra.mxu0 0
    %1262 = vmatprep.mubr.bf16.mxu0 0
    %1263 = vmatmul.mubr.bf16.gmra.mrb[0].mxu0 %v1228
    %v1264 = vpop.f32.mrb[0].mxu0
    %v1265 = vadd.f32 0.0, %v1264
    %v1266 = vpop.f32.mrb[0].mxu0
    %v1267 = vpop.f32.mrb[0].mxu0
    %v1268 = vpop.f32.mrb[0].mxu0
    %1269 = vdwg.mxu0
    %v1270 = vadd.f32 %v1088, %v1265
    %v1271 = vld [vmem:[%s5] sm:$0xff]
    %v1272 = vld [vmem:[%s5 + $0x8] sm:$0xff]
    %v1273 = vld [vmem:[%s5 + $0x10] sm:$0xff]
    %v1274 = vld [vmem:[%s5 + $0x18] sm:$0xff]
    %v1275 = vld [vmem:[%s5 + $0x20] sm:$0xff]
    %v1276 = vld [vmem:[%s5 + $0x28] sm:$0xff]
    %v1277 = vld [vmem:[%s5 + $0x30] sm:$0xff]
    %v1278 = vld [vmem:[%s5 + $0x38] sm:$0xff]
    %v1287 = vunpack.c.l.b16 %v1271
    %v1288 = vunpack.c.h.b16 %v1271
    %v1289 = vunpack.c.l.b16 %v1272
    %v1290 = vunpack.c.h.b16 %v1272
    %v1291 = vunpack.c.l.b16 %v1273
    %v1292 = vunpack.c.h.b16 %v1273
    %v1293 = vunpack.c.l.b16 %v1274
    %v1294 = vunpack.c.h.b16 %v1274
    %v1295 = vunpack.c.l.b16 %v1275
    %v1296 = vunpack.c.h.b16 %v1275
    %v1297 = vunpack.c.l.b16 %v1276
    %v1298 = vunpack.c.h.b16 %v1276
    %v1299 = vunpack.c.l.b16 %v1277
    %v1300 = vunpack.c.h.b16 %v1277
    %v1301 = vunpack.c.l.b16 %v1278
    %v1302 = vunpack.c.h.b16 %v1278
    %v1303 = vpack.c.b16 %v1289, %v1287
    %v1304 = vpack.c.b16 %v1290, %v1288
    %v1305 = vpack.c.b16 %v1293, %v1291
    %v1306 = vpack.c.b16 %v1294, %v1292
    %v1307 = vpack.c.b16 %v1297, %v1295
    %v1308 = vpack.c.b16 %v1298, %v1296
    %v1309 = vpack.c.b16 %v1301, %v1299
    %v1310 = vpack.c.b16 %v1302, %v1300
    %1319 = vmatprep.subr.bf16.mxu0 %v1304
    %1320 = vmatpush1.bf16.msra.mxu0 %v1303
    %1321 = vmatprep.subr.bf16.mxu0 %v1306
    %1322 = vmatpush1.bf16.msra.mxu0 %v1305
    %1323 = vmatprep.subr.bf16.mxu0 %v1308
    %1324 = vmatpush1.bf16.msra.mxu0 %v1307
    %1325 = vmatprep.subr.bf16.mxu0 %v1310
    %1326 = vmatpush1.bf16.msra.mxu0 %v1309
    %1327 = vmatprep.subr.bf16.mxu0 0
    %1328 = vmatpush1.bf16.msra.mxu0 0
    %1329 = vmatprep.subr.bf16.mxu0 0
    %1330 = vmatpush1.bf16.msra.mxu0 0
    %1331 = vmatprep.subr.bf16.mxu0 0
    %1332 = vmatpush1.bf16.msra.mxu0 0
    %1333 = vmatprep.subr.bf16.mxu0 0
    %1334 = vmatpush1.bf16.msra.mxu0 0
    %1335 = vmatprep.subr.bf16.mxu0 0
    %1336 = vmatpush1.bf16.msra.mxu0 0
    %1337 = vmatprep.subr.bf16.mxu0 0
    %1338 = vmatpush1.bf16.msra.mxu0 0
    %1339 = vmatprep.subr.bf16.mxu0 0
    %1340 = vmatpush1.bf16.msra.mxu0 0
    %1341 = vmatprep.subr.bf16.mxu0 0
    %1342 = vmatpush1.bf16.msra.mxu0 0
    %1343 = vmatprep.subr.bf16.mxu0 0
    %1344 = vmatpush1.bf16.msra.mxu0 0
    %1345 = vmatprep.subr.bf16.mxu0 0
    %1346 = vmatpush1.bf16.msra.mxu0 0
    %1347 = vmatprep.subr.bf16.mxu0 0
    %1348 = vmatpush1.bf16.msra.mxu0 0
    %1349 = vmatprep.subr.bf16.mxu0 0
    %1350 = vmatpush1.bf16.msra.mxu0 0
    %1351 = vmatprep.mubr.bf16.mxu0 0
    %1352 = vmatmul.mubr.bf16.gmra.mrb[0].mxu0 %v125
    %v1353 = vpop.f32.mrb[0].mxu0
    %v1354 = vadd.f32 0.0, %v1353
    %v1355 = vpop.f32.mrb[0].mxu0
    %v1356 = vadd.f32 0.0, %v1355
    %v1357 = vpop.f32.mrb[0].mxu0
    %v1358 = vpop.f32.mrb[0].mxu0
    %1359 = vdwg.mxu0
    %v1360 = vxor.u32 %v1354, 2147483648
    %v1361 = vmul.f32 %v1360, 1.442695
    %v1362 = vpow.pop %v1361
    %v1363 = vadd.f32 %v1362, 1.0
    %v1364 = vrcp.pop %v1363
    %v1365 = vmul.f32 1.0, %v1364
    %v1366 = vmul.f32 %v1354, %v1365
    %v1367 = vmul.f32 %v1366, %v1356
    %v1368 = vpack.c.bf16 %v1367, %v1367
    %v1369 = vld [vmem:[%s6] sm:$0xf]
    %v1370 = vld [vmem:[%s6 + $0x4] sm:$0xf]
    %v1371 = vld [vmem:[%s6 + $0x8] sm:$0xf]
    %v1372 = vld [vmem:[%s6 + $0xc] sm:$0xf]
    %v1373 = vld [vmem:[%s6 + $0x10] sm:$0xf]
    %v1374 = vld [vmem:[%s6 + $0x14] sm:$0xf]
    %v1375 = vld [vmem:[%s6 + $0x18] sm:$0xf]
    %v1376 = vld [vmem:[%s6 + $0x1c] sm:$0xf]
    %v1377 = vld [vmem:[%s6 + $0x20] sm:$0xf]
    %v1378 = vld [vmem:[%s6 + $0x24] sm:$0xf]
    %v1379 = vld [vmem:[%s6 + $0x28] sm:$0xf]
    %v1380 = vld [vmem:[%s6 + $0x2c] sm:$0xf]
    %v1381 = vld [vmem:[%s6 + $0x30] sm:$0xf]
    %v1382 = vld [vmem:[%s6 + $0x34] sm:$0xf]
    %v1383 = vld [vmem:[%s6 + $0x38] sm:$0xf]
    %v1384 = vld [vmem:[%s6 + $0x3c] sm:$0xf]
    %v1401 = vunpack.c.l.b16 %v1369
    %v1402 = vunpack.c.l.b16 %v1370
    %v1403 = vunpack.c.l.b16 %v1371
    %v1404 = vunpack.c.l.b16 %v1372
    %v1405 = vunpack.c.l.b16 %v1373
    %v1406 = vunpack.c.l.b16 %v1374
    %v1407 = vunpack.c.l.b16 %v1375
    %v1408 = vunpack.c.l.b16 %v1376
    %v1409 = vunpack.c.l.b16 %v1377
    %v1410 = vunpack.c.l.b16 %v1378
    %v1411 = vunpack.c.l.b16 %v1379
    %v1412 = vunpack.c.l.b16 %v1380
    %v1413 = vunpack.c.l.b16 %v1381
    %v1414 = vunpack.c.l.b16 %v1382
    %v1415 = vunpack.c.l.b16 %v1383
    %v1416 = vunpack.c.l.b16 %v1384
    %v1417 = vpack.c.b16 %v1402, %v1401
    %v1418 = vpack.c.b16 %v1404, %v1403
    %v1419 = vpack.c.b16 %v1406, %v1405
    %v1420 = vpack.c.b16 %v1408, %v1407
    %v1421 = vpack.c.b16 %v1410, %v1409
    %v1422 = vpack.c.b16 %v1412, %v1411
    %v1423 = vpack.c.b16 %v1414, %v1413
    %v1424 = vpack.c.b16 %v1416, %v1415
    %1433 = vmatprep.subr.bf16.mxu0 0
    %1434 = vmatpush1.bf16.msra.mxu0 %v1417
    %1435 = vmatprep.subr.bf16.mxu0 0
    %1436 = vmatpush1.bf16.msra.mxu0 %v1418
    %1437 = vmatprep.subr.bf16.mxu0 0
    %1438 = vmatpush1.bf16.msra.mxu0 %v1419
    %1439 = vmatprep.subr.bf16.mxu0 0
    %1440 = vmatpush1.bf16.msra.mxu0 %v1420
    %1441 = vmatprep.subr.bf16.mxu0 0
    %1442 = vmatpush1.bf16.msra.mxu0 %v1421
    %1443 = vmatprep.subr.bf16.mxu0 0
    %1444 = vmatpush1.bf16.msra.mxu0 %v1422
    %1445 = vmatprep.subr.bf16.mxu0 0
    %1446 = vmatpush1.bf16.msra.mxu0 %v1423
    %1447 = vmatprep.subr.bf16.mxu0 0
    %1448 = vmatpush1.bf16.msra.mxu0 %v1424
    %1449 = vmatprep.subr.bf16.mxu0 0
    %1450 = vmatpush1.bf16.msra.mxu0 0
    %1451 = vmatprep.subr.bf16.mxu0 0
    %1452 = vmatpush1.bf16.msra.mxu0 0
    %1453 = vmatprep.subr.bf16.mxu0 0
    %1454 = vmatpush1.bf16.msra.mxu0 0
    %1455 = vmatprep.subr.bf16.mxu0 0
    %1456 = vmatpush1.bf16.msra.mxu0 0
    %1457 = vmatprep.subr.bf16.mxu0 0
    %1458 = vmatpush1.bf16.msra.mxu0 0
    %1459 = vmatprep.subr.bf16.mxu0 0
    %1460 = vmatpush1.bf16.msra.mxu0 0
    %1461 = vmatprep.subr.bf16.mxu0 0
    %1462 = vmatpush1.bf16.msra.mxu0 0
    %1463 = vmatprep.subr.bf16.mxu0 0
    %1464 = vmatpush1.bf16.msra.mxu0 0
    %1465 = vmatprep.mubr.bf16.mxu0 0
    %1466 = vmatmul.mubr.bf16.gmra.mrb[0].mxu0 %v1368
    %v1467 = vpop.f32.mrb[0].mxu0
    %v1468 = vadd.f32 0.0, %v1467
    %v1469 = vpop.f32.mrb[0].mxu0
    %v1470 = vpop.f32.mrb[0].mxu0
    %v1471 = vpop.f32.mrb[0].mxu0
    %1472 = vdwg.mxu0
    %v1473 = vadd.f32 %v1270, %v1468
    %v1474 = vpack.c.bf16 %v1473, %v1473
    %1475 = vst.msk [vmem:[#allocation8] sm:$0xf] %vm66, %v1474
    %s1476 = smul.u32 1, 1
    %s1477 = sshll.u32 %s1476, 4
    %1478 = dma.done [#allocation4], %s1477
    %s1479 = sshll.u32 %s1476, 4
    %1480 = dma.done %s284, %s1479
    %s1481 = sshll.u32 %s1476, 4
    %1482 = dma.done %s300, %s1481
    %s1483 = sshll.u32 %s1476, 4
    %1484 = dma.done %s315, %s1483
    %s1485 = sshll.u32 %s1476, 4
    %1486 = dma.done %s331, %s1485
    %s1487 = sshll.u32 %s1476, 4
    %1488 = dma.done %s346, %s1487
    %s1489 = sshll.u32 %s1476, 4
    %1490 = dma.done %s362, %s1489
    %s1491 = sshll.u32 %s1476, 4
    %1492 = dma.done %s377, %s1491
    %s1493 = sshll.u32 %s1476, 4
    %1494 = dma.done %s393, %s1493
    %s1495 = sshll.u32 %s1476, 4
    %1496 = dma.done %s408, %s1495
    %s1497 = sshll.u32 %s1476, 4
    %1498 = dma.done %s424, %s1497
    %s1499 = sshll.u32 %s1476, 4
    %1500 = dma.done %s439, %s1499
    %s1501 = sshll.u32 %s1476, 4
    %1502 = dma.done %s455, %s1501
    %s1503 = sshll.u32 %s1476, 4
    %1504 = dma.done %s470, %s1503
    %s1505 = sshll.u32 %s1476, 4
    %1506 = dma.done %s486, %s1505
    %s1507 = sshll.u32 %s1476, 4
    %1508 = dma.done %s501, %s1507
    // Predicated region
    $region114: #{flash_cohere_layer.1} parent=1 // pred_check
      _
    $region115: #{flash_cohere_layer.1} parent=1 // pred_check_branch
      %1510 = sbr.rel (0) target = $region117
    $region116: #{flash_cohere_layer.1} parent=1 // pred_region
      %s1512 = ssub.s32 64, 64
      %1513 = vsyncadd [#allocation6], %s1512
      %s1515 = sshll.u32 [#allocation8], 4
      %s1516 = int_to_ptr.vmem [resolvable:$true] %s1515
      %1518 = dma.vmem_to_hbm [thread:$0]  %s1516, 64, %s13, [#allocation6]
    $region117: #{flash_cohere_layer.1} parent=1 // pred_fallthru
      _
    // Predicated region
    $region118: #{flash_cohere_layer.1} parent=1 // pred_check
      _
    $region119: #{flash_cohere_layer.1} parent=1 // pred_check_branch
      %1520 = sbr.rel (0) target = $region121
    $region120: #{flash_cohere_layer.1} parent=1 // pred_region
      %s1522 = ssub.s32 64, 64
      %1523 = vsyncadd [#allocation10], %s1522
      %s1525 = sshll.u32 [#allocation9], 4
      %s1526 = int_to_ptr.vmem [resolvable:$true] %s1525
      %1528 = dma.vmem_to_hbm [thread:$0]  %s1526, 64, %s14, [#allocation10]
    $region121: #{flash_cohere_layer.1} parent=1 // pred_fallthru
      _
    // Predicated region
    $region122: #{flash_cohere_layer.1} parent=1 // pred_check
      _
    $region123: #{flash_cohere_layer.1} parent=1 // pred_check_branch
      %1530 = sbr.rel (0) target = $region125
    $region124: #{flash_cohere_layer.1} parent=1 // pred_region
      %1531 = dma.done [#allocation6], 64
    $region125: #{flash_cohere_layer.1} parent=1 // pred_fallthru
      _
    // Predicated region
    $region126: #{flash_cohere_layer.1} parent=1 // pred_check
      _
    $region127: #{flash_cohere_layer.1} parent=1 // pred_check_branch
      %1533 = sbr.rel (0) target = $region129
    $region128: #{flash_cohere_layer.1} parent=1 // pred_region
      %1534 = dma.done [#allocation10], 64
    $region129: #{flash_cohere_layer.1} parent=1 // pred_fallthru
      _
    %1535 = vsyncpa [#allocation6], 1
    %1536 = vsyncpa [#allocation10], 1
    %1537 = vsyncpa [#allocation7], 1
  %1538 = vsyncmov [#allocation4]
  %s1539 = vpop.sfrf %1538
  %p1540 = scmp.eq.s32.totalorder %s1539, 0
  %p1541 = pneg %p1540
  %1543 = shalt.err (%p1541)
  %s1544 = scalar_lea.sflag [#allocation4], 1
  %1545 = vsyncmov %s1544
  %s1546 = vpop.sfrf %1545
  %p1547 = scmp.eq.s32.totalorder %s1546, 0
  %p1548 = pneg %p1547
  %1550 = shalt.err (%p1548)
  %s1551 = scalar_lea.sflag [#allocation4], 2
  %1552 = vsyncmov %s1551
  %s1553 = vpop.sfrf %1552
  %p1554 = scmp.eq.s32.totalorder %s1553, 0
  %p1555 = pneg %p1554
  %1557 = shalt.err (%p1555)
  %s1558 = scalar_lea.sflag [#allocation4], 3
  %1559 = vsyncmov %s1558
  %s1560 = vpop.sfrf %1559
  %p1561 = scmp.eq.s32.totalorder %s1560, 0
  %p1562 = pneg %p1561
  %1564 = shalt.err (%p1562)
  %s1565 = scalar_lea.sflag [#allocation4], 4
  %1566 = vsyncmov %s1565
  %s1567 = vpop.sfrf %1566
  %p1568 = scmp.eq.s32.totalorder %s1567, 0
  %p1569 = pneg %p1568
  %1571 = shalt.err (%p1569)
  %s1572 = scalar_lea.sflag [#allocation4], 5
  %1573 = vsyncmov %s1572
  %s1574 = vpop.sfrf %1573
  %p1575 = scmp.eq.s32.totalorder %s1574, 0
  %p1576 = pneg %p1575
  %1578 = shalt.err (%p1576)
  %s1579 = scalar_lea.sflag [#allocation4], 6
  %1580 = vsyncmov %s1579
  %s1581 = vpop.sfrf %1580
  %p1582 = scmp.eq.s32.totalorder %s1581, 0
  %p1583 = pneg %p1582
  %1585 = shalt.err (%p1583)
  %s1586 = scalar_lea.sflag [#allocation4], 7
  %1587 = vsyncmov %s1586
  %s1588 = vpop.sfrf %1587
  %p1589 = scmp.eq.s32.totalorder %s1588, 0
  %p1590 = pneg %p1589
  %1592 = shalt.err (%p1590)
  %s1593 = scalar_lea.sflag [#allocation4], 8
  %1594 = vsyncmov %s1593
  %s1595 = vpop.sfrf %1594
  %p1596 = scmp.eq.s32.totalorder %s1595, 0
  %p1597 = pneg %p1596
  %1599 = shalt.err (%p1597)
  %s1600 = scalar_lea.sflag [#allocation4], 9
  %1601 = vsyncmov %s1600
  %s1602 = vpop.sfrf %1601
  %p1603 = scmp.eq.s32.totalorder %s1602, 0
  %p1604 = pneg %p1603
  %1606 = shalt.err (%p1604)
  %s1607 = scalar_lea.sflag [#allocation4], 10
  %1608 = vsyncmov %s1607
  %s1609 = vpop.sfrf %1608
  %p1610 = scmp.eq.s32.totalorder %s1609, 0
  %p1611 = pneg %p1610
  %1613 = shalt.err (%p1611)
  %s1614 = scalar_lea.sflag [#allocation4], 11
  %1615 = vsyncmov %s1614
  %s1616 = vpop.sfrf %1615
  %p1617 = scmp.eq.s32.totalorder %s1616, 0
  %p1618 = pneg %p1617
  %1620 = shalt.err (%p1618)
  %s1621 = scalar_lea.sflag [#allocation4], 12
  %1622 = vsyncmov %s1621
  %s1623 = vpop.sfrf %1622
  %p1624 = scmp.eq.s32.totalorder %s1623, 0
  %p1625 = pneg %p1624
  %1627 = shalt.err (%p1625)
  %s1628 = scalar_lea.sflag [#allocation4], 13
  %1629 = vsyncmov %s1628
  %s1630 = vpop.sfrf %1629
  %p1631 = scmp.eq.s32.totalorder %s1630, 0
  %p1632 = pneg %p1631
  %1634 = shalt.err (%p1632)
  %s1635 = scalar_lea.sflag [#allocation4], 14
  %1636 = vsyncmov %s1635
  %s1637 = vpop.sfrf %1636
  %p1638 = scmp.eq.s32.totalorder %s1637, 0
  %p1639 = pneg %p1638
  %1641 = shalt.err (%p1639)
  %s1642 = scalar_lea.sflag [#allocation4], 15
  %1643 = vsyncmov %s1642
  %s1644 = vpop.sfrf %1643
  %p1645 = scmp.eq.s32.totalorder %s1644, 0
  %p1646 = pneg %p1645
  %1648 = shalt.err (%p1646)

</llo_original>
